<compile_context>
chip_gen: v5e
topology: v5e:2x2
jax: 0.10.0
libtpu: 0.0.40
codegen_flags: <defaults>
</compile_context>

<pallas_src>
import functools
import math

import jax
import jax.numpy as jnp
from jax.experimental import pallas as pl
from jax.experimental.pallas import tpu as pltpu

EPS = 1e-5  # PyTorch nn.LayerNorm default


def _layernorm(x):
    """LayerNorm over the last dim, no affine (biased variance, eps inside rsqrt)."""
    m = jnp.mean(x, axis=-1, keepdims=True)
    c = x - m
    v = jnp.mean(c * c, axis=-1, keepdims=True)
    return c * jax.lax.rsqrt(v + EPS)


def global_cell_kernel(rgn_ref, stc_proj_ref, wr_ref,
                       g1_ref, b1_ref,
                       wq_ref, bq_ref, wk_ref, bk_ref, wv_ref, bv_ref,
                       g2_ref, b2_ref,
                       w1_ref, bf1_ref, w2_ref, bf2_ref,
                       out_ref, *, num_heads):
    """One grid step = one batch element.

    rgn_ref      : (1, R, E)  region features for batch b
    stc_proj_ref : (1, 1, E)  stc @ Ws + b_lin (precomputed, batched) for batch b
    wr_ref       : (E, E)     region half of GlobalCell.linear weight, (in, out)
    g1/b1        : (1, E)     SA.norm1 affine params
    wq/bq ...    : q/k/v projection weights (E,E) / biases (1,E)
    g2/b2        : (1, E)     SA.norm2 affine params
    w1/bf1       : (E, H), (1, H)   feed-forward fc1
    w2/bf2       : (H, E), (1, E)   feed-forward fc2
    out_ref      : (1, R, E)
    """
    f32 = jnp.float32
    rgn = rgn_ref[0].astype(f32)                                        # (R, E)

    # GlobalCell.linear on the concat, concat-free:
    #   linear(cat([rgn, stc], -1)) = rgn @ Wr + (stc @ Ws + b)
    x = jnp.dot(rgn, wr_ref[...], preferred_element_type=f32) + stc_proj_ref[0]

    # ---- SelfAttentionCell ----
    # norm1 (affine)
    n1 = _layernorm(x) * g1_ref[...] + b1_ref[...]                      # (R, E)

    q = jnp.dot(n1, wq_ref[...], preferred_element_type=f32) + bq_ref[...]
    k = jnp.dot(n1, wk_ref[...], preferred_element_type=f32) + bk_ref[...]
    v = jnp.dot(n1, wv_ref[...], preferred_element_type=f32) + bv_ref[...]

    embed = x.shape[-1]
    d_k = embed // num_heads
    scale = 1.0 / math.sqrt(d_k)

    # Multi-head attention via static lane slices (h=8 is a module constant).
    heads = []
    for h in range(num_heads):
        sl = slice(h * d_k, (h + 1) * d_k)
        qh, kh, vh = q[:, sl], k[:, sl], v[:, sl]                       # (R, d_k)
        s = jnp.dot(qh, kh.T, preferred_element_type=f32) * scale       # (R, R)
        s = s - jnp.max(s, axis=-1, keepdims=True)
        e = jnp.exp(s)
        p = e / jnp.sum(e, axis=-1, keepdims=True)                      # softmax
        heads.append(jnp.dot(p, vh, preferred_element_type=f32))        # (R, d_k)
    sa = jnp.concatenate(heads, axis=-1)                                # (R, E)
    # (AttentionLayer has no output projection; dropout p=0.)

    # norm2 (affine) + feed-forward + residual
    n2 = _layernorm(sa) * g2_ref[...] + b2_ref[...]
    hid = jnp.maximum(
        jnp.dot(n2, w1_ref[...], preferred_element_type=f32) + bf1_ref[...], 0.0)
    ff = jnp.dot(hid, w2_ref[...], preferred_element_type=f32) + bf2_ref[...]
    y = sa + ff

    # ---- GlobalCell.norm1: LayerNorm, elementwise_affine=False ----
    out_ref[0] = _layernorm(y).astype(out_ref.dtype)


def global_cell_pallas(rgn, stc, params, *, num_heads=8):
    B, R, E = rgn.shape
    H = params["W1"].shape[1]

    # Hoisted sentence projection: one batched (B,E)x(E,E) matmul instead of a
    # per-grid-step (1,E)x(E,E) skinny matmul (perf-review item #1/#2).
    stc_proj = (stc.astype(jnp.float32) @ params["Ws"].astype(jnp.float32)
                + params["b_lin"].astype(jnp.float32)).reshape(B, 1, E)

    row = lambda a: a.reshape(1, -1)
    const = lambda shp: pl.BlockSpec(shp, lambda b: (0, 0))  # weight: resident block

    kernel = functools.partial(global_cell_kernel, num_heads=num_heads)
    return pl.pallas_call(
        kernel,
        out_shape=jax.ShapeDtypeStruct((B, R, E), rgn.dtype),
        grid=(B,),
        in_specs=[
            pl.BlockSpec((1, R, E), lambda b: (b, 0, 0)),   # rgn (streamed)
            pl.BlockSpec((1, 1, E), lambda b: (b, 0, 0)),   # stc_proj (streamed)
            const((E, E)),                                  # Wr
            const((1, E)), const((1, E)),                   # g1, b1
            const((E, E)), const((1, E)),                   # Wq, bq
            const((E, E)), const((1, E)),                   # Wk, bk
            const((E, E)), const((1, E)),                   # Wv, bv
            const((1, E)), const((1, E)),                   # g2, b2
            const((E, H)), const((1, H)),                   # W1, bf1
            const((H, E)), const((1, E)),                   # W2, bf2
        ],
        out_specs=pl.BlockSpec((1, R, E), lambda b: (b, 0, 0)),
        compiler_params=pltpu.CompilerParams(
            dimension_semantics=("parallel",)),             # v7x: 2-TC batch sharding
    )(rgn, stc_proj,
      params["Wr"],
      row(params["g1"]), row(params["b1"]),
      params["Wq"], row(params["bq"]),
      params["Wk"], row(params["bk"]),
      params["Wv"], row(params["bv"]),
      row(params["g2"]), row(params["b2"]),
      params["W1"], row(params["bf1"]),
      params["W2"], row(params["bf2"]))


def global_cell_ref(rgn, stc, params, *, num_heads=8):
    """Pure-JAX reference mirroring the PyTorch GlobalCell forward exactly."""
    B, R, E = rgn.shape
    d_k = E // num_heads

    # linear(cat([rgn, repeat(stc, 'b d -> b k d')], -1))
    stc_cat = jnp.broadcast_to(stc[:, None, :], (B, R, E))
    x = jnp.concatenate([rgn, stc_cat], axis=-1)                        # (B, R, 2E)
    w_cat = jnp.concatenate([params["Wr"], params["Ws"]], axis=0)       # (2E, E)
    x_out = x @ w_cat + params["b_lin"]

    # SelfAttentionCell
    n1 = _layernorm(x_out) * params["g1"] + params["b1"]
    q = n1 @ params["Wq"] + params["bq"]
    k = n1 @ params["Wk"] + params["bk"]
    v = n1 @ params["Wv"] + params["bv"]
    qh = q.reshape(B, R, num_heads, d_k).transpose(0, 2, 1, 3)
    kh = k.reshape(B, R, num_heads, d_k).transpose(0, 2, 1, 3)
    vh = v.reshape(B, R, num_heads, d_k).transpose(0, 2, 1, 3)
    s = jnp.einsum("bhqd,bhkd->bhqk", qh, kh) / math.sqrt(d_k)
    p = jax.nn.softmax(s, axis=-1)
    att = jnp.einsum("bhqk,bhkd->bhqd", p, vh)
    sa = att.transpose(0, 2, 1, 3).reshape(B, R, E)

    n2 = _layernorm(sa) * params["g2"] + params["b2"]
    ff = jax.nn.relu(n2 @ params["W1"] + params["bf1"]) @ params["W2"] + params["bf2"]
    y = sa + ff
    return _layernorm(y)


if __name__ == "__main__":
    # Small, module-consistent shapes. embed_size is a multiple of 128 (lane
    # dense, perf-review item) and of h=8; mlp hidden = embed_size // 2
    # (mlp_ratio = 0.5 in SelfAttentionCell).
    B, R, E, NH = 2, 16, 128, 8
    H = E // 2

    key = jax.random.PRNGKey(0)
    ks = jax.random.split(key, 18)

    rgn = jax.random.normal(ks[0], (B, R, E), jnp.float32)
    stc = jax.random.normal(ks[1], (B, E), jnp.float32)

    def lin(kw, kb, fan_in, fan_out):
        # PyTorch nn.Linear-style init; weight stored pre-transposed as (in, out)
        # so y = x @ W + b is numerically identical to PyTorch's x @ W.T + b.
        lim = 1.0 / math.sqrt(fan_in)
        w = jax.random.uniform(kw, (fan_in, fan_out), jnp.float32, -lim, lim)
        b = jax.random.uniform(kb, (fan_out,), jnp.float32, -lim, lim)
        return w, b

    # GlobalCell.linear: (2E -> E), split into the rgn half and the stc half.
    w_cat, b_lin = lin(ks[2], ks[3], 2 * E, E)
    Wr, Ws = w_cat[:E], w_cat[E:]

    Wq, bq = lin(ks[4], ks[5], E, E)
    Wk, bk = lin(ks[6], ks[7], E, E)
    Wv, bv = lin(ks[8], ks[9], E, E)
    W1, bf1 = lin(ks[10], ks[11], E, H)
    W2, bf2 = lin(ks[12], ks[13], H, E)

    # Random affine LayerNorm params so the affine path is actually exercised.
    g1 = 1.0 + 0.1 * jax.random.normal(ks[14], (E,), jnp.float32)
    b1 = 0.1 * jax.random.normal(ks[15], (E,), jnp.float32)
    g2 = 1.0 + 0.1 * jax.random.normal(ks[16], (E,), jnp.float32)
    b2 = 0.1 * jax.random.normal(ks[17], (E,), jnp.float32)

    params = dict(Wr=Wr, Ws=Ws, b_lin=b_lin,
                  g1=g1, b1=b1, Wq=Wq, bq=bq, Wk=Wk, bk=bk, Wv=Wv, bv=bv,
                  g2=g2, b2=b2, W1=W1, bf1=bf1, W2=W2, bf2=bf2)

    out = global_cell_pallas(rgn, stc, params, num_heads=NH)
    out = jax.block_until_ready(out)

    ref = global_cell_ref(rgn, stc, params, num_heads=NH)
    assert out.shape == (B, R, E)
    assert jnp.allclose(out, ref, atol=2e-3, rtol=2e-3), "mismatch vs reference"

    print("KERNEL_OK")
</pallas_src>

<mosaic_0001>
module attributes {stable_mosaic.version = 11 : i64} {
  func.func @global_cell_kernel(%arg0: i32, %arg1: memref<1x16x128xf32, #tpu.memory_space<vmem>>, %arg2: memref<1x1x128xf32, #tpu.memory_space<vmem>>, %arg3: memref<128x128xf32, #tpu.memory_space<vmem>>, %arg4: memref<1x128xf32, #tpu.memory_space<vmem>>, %arg5: memref<1x128xf32, #tpu.memory_space<vmem>>, %arg6: memref<128x128xf32, #tpu.memory_space<vmem>>, %arg7: memref<1x128xf32, #tpu.memory_space<vmem>>, %arg8: memref<128x128xf32, #tpu.memory_space<vmem>>, %arg9: memref<1x128xf32, #tpu.memory_space<vmem>>, %arg10: memref<128x128xf32, #tpu.memory_space<vmem>>, %arg11: memref<1x128xf32, #tpu.memory_space<vmem>>, %arg12: memref<1x128xf32, #tpu.memory_space<vmem>>, %arg13: memref<1x128xf32, #tpu.memory_space<vmem>>, %arg14: memref<128x64xf32, #tpu.memory_space<vmem>>, %arg15: memref<1x64xf32, #tpu.memory_space<vmem>>, %arg16: memref<64x128xf32, #tpu.memory_space<vmem>>, %arg17: memref<1x128xf32, #tpu.memory_space<vmem>>, %arg18: memref<1x16x128xf32, #tpu.memory_space<vmem>>) attributes {dimension_semantics = [#tpu.dimension_semantics<parallel>], iteration_bounds = array<i64: 2>, scalar_prefetch = 0 : i64, scratch_operands = 0 : i64, tpu.core_type = #tpu.core_type<tc>, window_params = [{transform_indices = @transform_0, window_bounds = array<i64: 1, 16, 128>}, {transform_indices = @transform_1, window_bounds = array<i64: 1, 1, 128>}, {pipeline_mode = #tpu.pipeline_mode<synchronous>, transform_indices = @transform_2, window_bounds = array<i64: 128, 128>}, {pipeline_mode = #tpu.pipeline_mode<synchronous>, transform_indices = @transform_3, window_bounds = array<i64: 1, 128>}, {pipeline_mode = #tpu.pipeline_mode<synchronous>, transform_indices = @transform_4, window_bounds = array<i64: 1, 128>}, {pipeline_mode = #tpu.pipeline_mode<synchronous>, transform_indices = @transform_5, window_bounds = array<i64: 128, 128>}, {pipeline_mode = #tpu.pipeline_mode<synchronous>, transform_indices = @transform_6, window_bounds = array<i64: 1, 128>}, {pipeline_mode = #tpu.pipeline_mode<synchronous>, transform_indices = @transform_7, window_bounds = array<i64: 128, 128>}, {pipeline_mode = #tpu.pipeline_mode<synchronous>, transform_indices = @transform_8, window_bounds = array<i64: 1, 128>}, {pipeline_mode = #tpu.pipeline_mode<synchronous>, transform_indices = @transform_9, window_bounds = array<i64: 128, 128>}, {pipeline_mode = #tpu.pipeline_mode<synchronous>, transform_indices = @transform_10, window_bounds = array<i64: 1, 128>}, {pipeline_mode = #tpu.pipeline_mode<synchronous>, transform_indices = @transform_11, window_bounds = array<i64: 1, 128>}, {pipeline_mode = #tpu.pipeline_mode<synchronous>, transform_indices = @transform_12, window_bounds = array<i64: 1, 128>}, {pipeline_mode = #tpu.pipeline_mode<synchronous>, transform_indices = @transform_13, window_bounds = array<i64: 128, 64>}, {pipeline_mode = #tpu.pipeline_mode<synchronous>, transform_indices = @transform_14, window_bounds = array<i64: 1, 64>}, {pipeline_mode = #tpu.pipeline_mode<synchronous>, transform_indices = @transform_15, window_bounds = array<i64: 64, 128>}, {pipeline_mode = #tpu.pipeline_mode<synchronous>, transform_indices = @transform_16, window_bounds = array<i64: 1, 128>}, {transform_indices = @transform_17, window_bounds = array<i64: 1, 16, 128>}]} {
    %c0 = arith.constant 0 : index
    %c0_0 = arith.constant 0 : index
    %c0_1 = arith.constant 0 : index
    %0 = vector.load %arg1[%c0, %c0_0, %c0_1] : memref<1x16x128xf32, #tpu.memory_space<vmem>>, vector<1x16x128xf32>
    %1 = vector.shape_cast %0 : vector<1x16x128xf32> to vector<16x128xf32>
    %c0_2 = arith.constant 0 : index
    %c0_3 = arith.constant 0 : index
    %2 = vector.load %arg3[%c0_2, %c0_3] : memref<128x128xf32, #tpu.memory_space<vmem>>, vector<128x128xf32>
    %cst = arith.constant dense<0.000000e+00> : vector<16x128xf32>
    %3 = tpu.matmul %1, %2, %cst {dimension_numbers = #tpu.dot_dimension_numbers<[1], [0], [0], [1], [0, 0, 1, 1], [], []>} : vector<16x128xf32>, vector<128x128xf32>, vector<16x128xf32> -> vector<16x128xf32>
    %c0_4 = arith.constant 0 : index
    %c0_5 = arith.constant 0 : index
    %c0_6 = arith.constant 0 : index
    %4 = vector.load %arg2[%c0_4, %c0_5, %c0_6] : memref<1x1x128xf32, #tpu.memory_space<vmem>>, vector<1x1x128xf32>
    %5 = vector.shape_cast %4 : vector<1x1x128xf32> to vector<1x128xf32>
    %6 = vector.broadcast %5 : vector<1x128xf32> to vector<16x128xf32>
    %7 = arith.addf %3, %6 : vector<16x128xf32>
    %cst_7 = arith.constant dense<0.000000e+00> : vector<16xf32>
    %8 = vector.multi_reduction <add>, %7, %cst_7 [1] : vector<16x128xf32> to vector<16xf32>
    %9 = vector.shape_cast %8 : vector<16xf32> to vector<16x1xf32>
    %cst_8 = arith.constant 1.280000e+02 : f32
    %10 = vector.broadcast %cst_8 : f32 to vector<16x1xf32>
    %11 = arith.divf %9, %10 : vector<16x1xf32>
    %12 = vector.broadcast %11 : vector<16x1xf32> to vector<16x128xf32>
    %13 = arith.subf %7, %12 : vector<16x128xf32>
    %14 = arith.mulf %13, %13 : vector<16x128xf32>
    %cst_9 = arith.constant dense<0.000000e+00> : vector<16xf32>
    %15 = vector.multi_reduction <add>, %14, %cst_9 [1] : vector<16x128xf32> to vector<16xf32>
    %16 = vector.shape_cast %15 : vector<16xf32> to vector<16x1xf32>
    %cst_10 = arith.constant 1.280000e+02 : f32
    %17 = vector.broadcast %cst_10 : f32 to vector<16x1xf32>
    %18 = arith.divf %16, %17 : vector<16x1xf32>
    %cst_11 = arith.constant 9.99999974E-6 : f32
    %19 = vector.broadcast %cst_11 : f32 to vector<16x1xf32>
    %20 = arith.addf %18, %19 : vector<16x1xf32>
    %21 = math.rsqrt %20 : vector<16x1xf32>
    %22 = vector.broadcast %21 : vector<16x1xf32> to vector<16x128xf32>
    %23 = arith.mulf %13, %22 : vector<16x128xf32>
    %c0_12 = arith.constant 0 : index
    %c0_13 = arith.constant 0 : index
    %24 = vector.load %arg4[%c0_12, %c0_13] : memref<1x128xf32, #tpu.memory_space<vmem>>, vector<1x128xf32>
    %25 = vector.broadcast %24 : vector<1x128xf32> to vector<16x128xf32>
    %26 = arith.mulf %23, %25 : vector<16x128xf32>
    %c0_14 = arith.constant 0 : index
    %c0_15 = arith.constant 0 : index
    %27 = vector.load %arg5[%c0_14, %c0_15] : memref<1x128xf32, #tpu.memory_space<vmem>>, vector<1x128xf32>
    %28 = vector.broadcast %27 : vector<1x128xf32> to vector<16x128xf32>
    %29 = arith.addf %26, %28 : vector<16x128xf32>
    %c0_16 = arith.constant 0 : index
    %c0_17 = arith.constant 0 : index
    %30 = vector.load %arg6[%c0_16, %c0_17] : memref<128x128xf32, #tpu.memory_space<vmem>>, vector<128x128xf32>
    %cst_18 = arith.constant dense<0.000000e+00> : vector<16x128xf32>
    %31 = tpu.matmul %29, %30, %cst_18 {dimension_numbers = #tpu.dot_dimension_numbers<[1], [0], [0], [1], [0, 0, 1, 1], [], []>} : vector<16x128xf32>, vector<128x128xf32>, vector<16x128xf32> -> vector<16x128xf32>
    %c0_19 = arith.constant 0 : index
    %c0_20 = arith.constant 0 : index
    %32 = vector.load %arg7[%c0_19, %c0_20] : memref<1x128xf32, #tpu.memory_space<vmem>>, vector<1x128xf32>
    %33 = vector.broadcast %32 : vector<1x128xf32> to vector<16x128xf32>
    %34 = arith.addf %31, %33 : vector<16x128xf32>
    %c0_21 = arith.constant 0 : index
    %c0_22 = arith.constant 0 : index
    %35 = vector.load %arg8[%c0_21, %c0_22] : memref<128x128xf32, #tpu.memory_space<vmem>>, vector<128x128xf32>
    %cst_23 = arith.constant dense<0.000000e+00> : vector<16x128xf32>
    %36 = tpu.matmul %29, %35, %cst_23 {dimension_numbers = #tpu.dot_dimension_numbers<[1], [0], [0], [1], [0, 0, 1, 1], [], []>} : vector<16x128xf32>, vector<128x128xf32>, vector<16x128xf32> -> vector<16x128xf32>
    %c0_24 = arith.constant 0 : index
    %c0_25 = arith.constant 0 : index
    %37 = vector.load %arg9[%c0_24, %c0_25] : memref<1x128xf32, #tpu.memory_space<vmem>>, vector<1x128xf32>
    %38 = vector.broadcast %37 : vector<1x128xf32> to vector<16x128xf32>
    %39 = arith.addf %36, %38 : vector<16x128xf32>
    %c0_26 = arith.constant 0 : index
    %c0_27 = arith.constant 0 : index
    %40 = vector.load %arg10[%c0_26, %c0_27] : memref<128x128xf32, #tpu.memory_space<vmem>>, vector<128x128xf32>
    %cst_28 = arith.constant dense<0.000000e+00> : vector<16x128xf32>
    %41 = tpu.matmul %29, %40, %cst_28 {dimension_numbers = #tpu.dot_dimension_numbers<[1], [0], [0], [1], [0, 0, 1, 1], [], []>} : vector<16x128xf32>, vector<128x128xf32>, vector<16x128xf32> -> vector<16x128xf32>
    %c0_29 = arith.constant 0 : index
    %c0_30 = arith.constant 0 : index
    %42 = vector.load %arg11[%c0_29, %c0_30] : memref<1x128xf32, #tpu.memory_space<vmem>>, vector<1x128xf32>
    %43 = vector.broadcast %42 : vector<1x128xf32> to vector<16x128xf32>
    %44 = arith.addf %41, %43 : vector<16x128xf32>
    %45 = vector.extract_strided_slice %34 {offsets = [0, 0], sizes = [16, 16], strides = [1, 1]} : vector<16x128xf32> to vector<16x16xf32>
    %46 = vector.extract_strided_slice %39 {offsets = [0, 0], sizes = [16, 16], strides = [1, 1]} : vector<16x128xf32> to vector<16x16xf32>
    %47 = vector.extract_strided_slice %44 {offsets = [0, 0], sizes = [16, 16], strides = [1, 1]} : vector<16x128xf32> to vector<16x16xf32>
    %48 = tpu.transpose %46, [1, 0] : vector<16x16xf32> -> vector<16x16xf32>
    %cst_31 = arith.constant dense<0.000000e+00> : vector<16x16xf32>
    %49 = tpu.matmul %45, %48, %cst_31 {dimension_numbers = #tpu.dot_dimension_numbers<[1], [0], [0], [1], [0, 0, 1, 1], [], []>} : vector<16x16xf32>, vector<16x16xf32>, vector<16x16xf32> -> vector<16x16xf32>
    %cst_32 = arith.constant 2.500000e-01 : f32
    %50 = vector.broadcast %cst_32 : f32 to vector<16x16xf32>
    %51 = arith.mulf %49, %50 : vector<16x16xf32>
    %cst_33 = arith.constant dense<0xFF800000> : vector<16xf32>
    %52 = vector.multi_reduction <maximumf>, %51, %cst_33 [1] : vector<16x16xf32> to vector<16xf32>
    %53 = vector.shape_cast %52 : vector<16xf32> to vector<16x1xf32>
    %54 = vector.broadcast %53 : vector<16x1xf32> to vector<16x16xf32>
    %55 = arith.subf %51, %54 : vector<16x16xf32>
    %56 = math.exp %55 : vector<16x16xf32>
    %cst_34 = arith.constant dense<0.000000e+00> : vector<16xf32>
    %57 = vector.multi_reduction <add>, %56, %cst_34 [1] : vector<16x16xf32> to vector<16xf32>
    %58 = vector.shape_cast %57 : vector<16xf32> to vector<16x1xf32>
    %59 = vector.broadcast %58 : vector<16x1xf32> to vector<16x16xf32>
    %60 = arith.divf %56, %59 : vector<16x16xf32>
    %cst_35 = arith.constant dense<0.000000e+00> : vector<16x16xf32>
    %61 = tpu.matmul %60, %47, %cst_35 {dimension_numbers = #tpu.dot_dimension_numbers<[1], [0], [0], [1], [0, 0, 1, 1], [], []>} : vector<16x16xf32>, vector<16x16xf32>, vector<16x16xf32> -> vector<16x16xf32>
    %62 = vector.extract_strided_slice %34 {offsets = [0, 16], sizes = [16, 16], strides = [1, 1]} : vector<16x128xf32> to vector<16x16xf32>
    %63 = vector.extract_strided_slice %39 {offsets = [0, 16], sizes = [16, 16], strides = [1, 1]} : vector<16x128xf32> to vector<16x16xf32>
    %64 = vector.extract_strided_slice %44 {offsets = [0, 16], sizes = [16, 16], strides = [1, 1]} : vector<16x128xf32> to vector<16x16xf32>
    %65 = tpu.transpose %63, [1, 0] : vector<16x16xf32> -> vector<16x16xf32>
    %cst_36 = arith.constant dense<0.000000e+00> : vector<16x16xf32>
    %66 = tpu.matmul %62, %65, %cst_36 {dimension_numbers = #tpu.dot_dimension_numbers<[1], [0], [0], [1], [0, 0, 1, 1], [], []>} : vector<16x16xf32>, vector<16x16xf32>, vector<16x16xf32> -> vector<16x16xf32>
    %cst_37 = arith.constant 2.500000e-01 : f32
    %67 = vector.broadcast %cst_37 : f32 to vector<16x16xf32>
    %68 = arith.mulf %66, %67 : vector<16x16xf32>
    %cst_38 = arith.constant dense<0xFF800000> : vector<16xf32>
    %69 = vector.multi_reduction <maximumf>, %68, %cst_38 [1] : vector<16x16xf32> to vector<16xf32>
    %70 = vector.shape_cast %69 : vector<16xf32> to vector<16x1xf32>
    %71 = vector.broadcast %70 : vector<16x1xf32> to vector<16x16xf32>
    %72 = arith.subf %68, %71 : vector<16x16xf32>
    %73 = math.exp %72 : vector<16x16xf32>
    %cst_39 = arith.constant dense<0.000000e+00> : vector<16xf32>
    %74 = vector.multi_reduction <add>, %73, %cst_39 [1] : vector<16x16xf32> to vector<16xf32>
    %75 = vector.shape_cast %74 : vector<16xf32> to vector<16x1xf32>
    %76 = vector.broadcast %75 : vector<16x1xf32> to vector<16x16xf32>
    %77 = arith.divf %73, %76 : vector<16x16xf32>
    %cst_40 = arith.constant dense<0.000000e+00> : vector<16x16xf32>
    %78 = tpu.matmul %77, %64, %cst_40 {dimension_numbers = #tpu.dot_dimension_numbers<[1], [0], [0], [1], [0, 0, 1, 1], [], []>} : vector<16x16xf32>, vector<16x16xf32>, vector<16x16xf32> -> vector<16x16xf32>
    %79 = vector.extract_strided_slice %34 {offsets = [0, 32], sizes = [16, 16], strides = [1, 1]} : vector<16x128xf32> to vector<16x16xf32>
    %80 = vector.extract_strided_slice %39 {offsets = [0, 32], sizes = [16, 16], strides = [1, 1]} : vector<16x128xf32> to vector<16x16xf32>
    %81 = vector.extract_strided_slice %44 {offsets = [0, 32], sizes = [16, 16], strides = [1, 1]} : vector<16x128xf32> to vector<16x16xf32>
    %82 = tpu.transpose %80, [1, 0] : vector<16x16xf32> -> vector<16x16xf32>
    %cst_41 = arith.constant dense<0.000000e+00> : vector<16x16xf32>
    %83 = tpu.matmul %79, %82, %cst_41 {dimension_numbers = #tpu.dot_dimension_numbers<[1], [0], [0], [1], [0, 0, 1, 1], [], []>} : vector<16x16xf32>, vector<16x16xf32>, vector<16x16xf32> -> vector<16x16xf32>
    %cst_42 = arith.constant 2.500000e-01 : f32
    %84 = vector.broadcast %cst_42 : f32 to vector<16x16xf32>
    %85 = arith.mulf %83, %84 : vector<16x16xf32>
    %cst_43 = arith.constant dense<0xFF800000> : vector<16xf32>
    %86 = vector.multi_reduction <maximumf>, %85, %cst_43 [1] : vector<16x16xf32> to vector<16xf32>
    %87 = vector.shape_cast %86 : vector<16xf32> to vector<16x1xf32>
    %88 = vector.broadcast %87 : vector<16x1xf32> to vector<16x16xf32>
    %89 = arith.subf %85, %88 : vector<16x16xf32>
    %90 = math.exp %89 : vector<16x16xf32>
    %cst_44 = arith.constant dense<0.000000e+00> : vector<16xf32>
    %91 = vector.multi_reduction <add>, %90, %cst_44 [1] : vector<16x16xf32> to vector<16xf32>
    %92 = vector.shape_cast %91 : vector<16xf32> to vector<16x1xf32>
    %93 = vector.broadcast %92 : vector<16x1xf32> to vector<16x16xf32>
    %94 = arith.divf %90, %93 : vector<16x16xf32>
    %cst_45 = arith.constant dense<0.000000e+00> : vector<16x16xf32>
    %95 = tpu.matmul %94, %81, %cst_45 {dimension_numbers = #tpu.dot_dimension_numbers<[1], [0], [0], [1], [0, 0, 1, 1], [], []>} : vector<16x16xf32>, vector<16x16xf32>, vector<16x16xf32> -> vector<16x16xf32>
    %96 = vector.extract_strided_slice %34 {offsets = [0, 48], sizes = [16, 16], strides = [1, 1]} : vector<16x128xf32> to vector<16x16xf32>
    %97 = vector.extract_strided_slice %39 {offsets = [0, 48], sizes = [16, 16], strides = [1, 1]} : vector<16x128xf32> to vector<16x16xf32>
    %98 = vector.extract_strided_slice %44 {offsets = [0, 48], sizes = [16, 16], strides = [1, 1]} : vector<16x128xf32> to vector<16x16xf32>
    %99 = tpu.transpose %97, [1, 0] : vector<16x16xf32> -> vector<16x16xf32>
    %cst_46 = arith.constant dense<0.000000e+00> : vector<16x16xf32>
    %100 = tpu.matmul %96, %99, %cst_46 {dimension_numbers = #tpu.dot_dimension_numbers<[1], [0], [0], [1], [0, 0, 1, 1], [], []>} : vector<16x16xf32>, vector<16x16xf32>, vector<16x16xf32> -> vector<16x16xf32>
    %cst_47 = arith.constant 2.500000e-01 : f32
    %101 = vector.broadcast %cst_47 : f32 to vector<16x16xf32>
    %102 = arith.mulf %100, %101 : vector<16x16xf32>
    %cst_48 = arith.constant dense<0xFF800000> : vector<16xf32>
    %103 = vector.multi_reduction <maximumf>, %102, %cst_48 [1] : vector<16x16xf32> to vector<16xf32>
    %104 = vector.shape_cast %103 : vector<16xf32> to vector<16x1xf32>
    %105 = vector.broadcast %104 : vector<16x1xf32> to vector<16x16xf32>
    %106 = arith.subf %102, %105 : vector<16x16xf32>
    %107 = math.exp %106 : vector<16x16xf32>
    %cst_49 = arith.constant dense<0.000000e+00> : vector<16xf32>
    %108 = vector.multi_reduction <add>, %107, %cst_49 [1] : vector<16x16xf32> to vector<16xf32>
    %109 = vector.shape_cast %108 : vector<16xf32> to vector<16x1xf32>
    %110 = vector.broadcast %109 : vector<16x1xf32> to vector<16x16xf32>
    %111 = arith.divf %107, %110 : vector<16x16xf32>
    %cst_50 = arith.constant dense<0.000000e+00> : vector<16x16xf32>
    %112 = tpu.matmul %111, %98, %cst_50 {dimension_numbers = #tpu.dot_dimension_numbers<[1], [0], [0], [1], [0, 0, 1, 1], [], []>} : vector<16x16xf32>, vector<16x16xf32>, vector<16x16xf32> -> vector<16x16xf32>
    %113 = vector.extract_strided_slice %34 {offsets = [0, 64], sizes = [16, 16], strides = [1, 1]} : vector<16x128xf32> to vector<16x16xf32>
    %114 = vector.extract_strided_slice %39 {offsets = [0, 64], sizes = [16, 16], strides = [1, 1]} : vector<16x128xf32> to vector<16x16xf32>
    %115 = vector.extract_strided_slice %44 {offsets = [0, 64], sizes = [16, 16], strides = [1, 1]} : vector<16x128xf32> to vector<16x16xf32>
    %116 = tpu.transpose %114, [1, 0] : vector<16x16xf32> -> vector<16x16xf32>
    %cst_51 = arith.constant dense<0.000000e+00> : vector<16x16xf32>
    %117 = tpu.matmul %113, %116, %cst_51 {dimension_numbers = #tpu.dot_dimension_numbers<[1], [0], [0], [1], [0, 0, 1, 1], [], []>} : vector<16x16xf32>, vector<16x16xf32>, vector<16x16xf32> -> vector<16x16xf32>
    %cst_52 = arith.constant 2.500000e-01 : f32
    %118 = vector.broadcast %cst_52 : f32 to vector<16x16xf32>
    %119 = arith.mulf %117, %118 : vector<16x16xf32>
    %cst_53 = arith.constant dense<0xFF800000> : vector<16xf32>
    %120 = vector.multi_reduction <maximumf>, %119, %cst_53 [1] : vector<16x16xf32> to vector<16xf32>
    %121 = vector.shape_cast %120 : vector<16xf32> to vector<16x1xf32>
    %122 = vector.broadcast %121 : vector<16x1xf32> to vector<16x16xf32>
    %123 = arith.subf %119, %122 : vector<16x16xf32>
    %124 = math.exp %123 : vector<16x16xf32>
    %cst_54 = arith.constant dense<0.000000e+00> : vector<16xf32>
    %125 = vector.multi_reduction <add>, %124, %cst_54 [1] : vector<16x16xf32> to vector<16xf32>
    %126 = vector.shape_cast %125 : vector<16xf32> to vector<16x1xf32>
    %127 = vector.broadcast %126 : vector<16x1xf32> to vector<16x16xf32>
    %128 = arith.divf %124, %127 : vector<16x16xf32>
    %cst_55 = arith.constant dense<0.000000e+00> : vector<16x16xf32>
    %129 = tpu.matmul %128, %115, %cst_55 {dimension_numbers = #tpu.dot_dimension_numbers<[1], [0], [0], [1], [0, 0, 1, 1], [], []>} : vector<16x16xf32>, vector<16x16xf32>, vector<16x16xf32> -> vector<16x16xf32>
    %130 = vector.extract_strided_slice %34 {offsets = [0, 80], sizes = [16, 16], strides = [1, 1]} : vector<16x128xf32> to vector<16x16xf32>
    %131 = vector.extract_strided_slice %39 {offsets = [0, 80], sizes = [16, 16], strides = [1, 1]} : vector<16x128xf32> to vector<16x16xf32>
    %132 = vector.extract_strided_slice %44 {offsets = [0, 80], sizes = [16, 16], strides = [1, 1]} : vector<16x128xf32> to vector<16x16xf32>
    %133 = tpu.transpose %131, [1, 0] : vector<16x16xf32> -> vector<16x16xf32>
    %cst_56 = arith.constant dense<0.000000e+00> : vector<16x16xf32>
    %134 = tpu.matmul %130, %133, %cst_56 {dimension_numbers = #tpu.dot_dimension_numbers<[1], [0], [0], [1], [0, 0, 1, 1], [], []>} : vector<16x16xf32>, vector<16x16xf32>, vector<16x16xf32> -> vector<16x16xf32>
    %cst_57 = arith.constant 2.500000e-01 : f32
    %135 = vector.broadcast %cst_57 : f32 to vector<16x16xf32>
    %136 = arith.mulf %134, %135 : vector<16x16xf32>
    %cst_58 = arith.constant dense<0xFF800000> : vector<16xf32>
    %137 = vector.multi_reduction <maximumf>, %136, %cst_58 [1] : vector<16x16xf32> to vector<16xf32>
    %138 = vector.shape_cast %137 : vector<16xf32> to vector<16x1xf32>
    %139 = vector.broadcast %138 : vector<16x1xf32> to vector<16x16xf32>
    %140 = arith.subf %136, %139 : vector<16x16xf32>
    %141 = math.exp %140 : vector<16x16xf32>
    %cst_59 = arith.constant dense<0.000000e+00> : vector<16xf32>
    %142 = vector.multi_reduction <add>, %141, %cst_59 [1] : vector<16x16xf32> to vector<16xf32>
    %143 = vector.shape_cast %142 : vector<16xf32> to vector<16x1xf32>
    %144 = vector.broadcast %143 : vector<16x1xf32> to vector<16x16xf32>
    %145 = arith.divf %141, %144 : vector<16x16xf32>
    %cst_60 = arith.constant dense<0.000000e+00> : vector<16x16xf32>
    %146 = tpu.matmul %145, %132, %cst_60 {dimension_numbers = #tpu.dot_dimension_numbers<[1], [0], [0], [1], [0, 0, 1, 1], [], []>} : vector<16x16xf32>, vector<16x16xf32>, vector<16x16xf32> -> vector<16x16xf32>
    %147 = vector.extract_strided_slice %34 {offsets = [0, 96], sizes = [16, 16], strides = [1, 1]} : vector<16x128xf32> to vector<16x16xf32>
    %148 = vector.extract_strided_slice %39 {offsets = [0, 96], sizes = [16, 16], strides = [1, 1]} : vector<16x128xf32> to vector<16x16xf32>
    %149 = vector.extract_strided_slice %44 {offsets = [0, 96], sizes = [16, 16], strides = [1, 1]} : vector<16x128xf32> to vector<16x16xf32>
    %150 = tpu.transpose %148, [1, 0] : vector<16x16xf32> -> vector<16x16xf32>
    %cst_61 = arith.constant dense<0.000000e+00> : vector<16x16xf32>
    %151 = tpu.matmul %147, %150, %cst_61 {dimension_numbers = #tpu.dot_dimension_numbers<[1], [0], [0], [1], [0, 0, 1, 1], [], []>} : vector<16x16xf32>, vector<16x16xf32>, vector<16x16xf32> -> vector<16x16xf32>
    %cst_62 = arith.constant 2.500000e-01 : f32
    %152 = vector.broadcast %cst_62 : f32 to vector<16x16xf32>
    %153 = arith.mulf %151, %152 : vector<16x16xf32>
    %cst_63 = arith.constant dense<0xFF800000> : vector<16xf32>
    %154 = vector.multi_reduction <maximumf>, %153, %cst_63 [1] : vector<16x16xf32> to vector<16xf32>
    %155 = vector.shape_cast %154 : vector<16xf32> to vector<16x1xf32>
    %156 = vector.broadcast %155 : vector<16x1xf32> to vector<16x16xf32>
    %157 = arith.subf %153, %156 : vector<16x16xf32>
    %158 = math.exp %157 : vector<16x16xf32>
    %cst_64 = arith.constant dense<0.000000e+00> : vector<16xf32>
    %159 = vector.multi_reduction <add>, %158, %cst_64 [1] : vector<16x16xf32> to vector<16xf32>
    %160 = vector.shape_cast %159 : vector<16xf32> to vector<16x1xf32>
    %161 = vector.broadcast %160 : vector<16x1xf32> to vector<16x16xf32>
    %162 = arith.divf %158, %161 : vector<16x16xf32>
    %cst_65 = arith.constant dense<0.000000e+00> : vector<16x16xf32>
    %163 = tpu.matmul %162, %149, %cst_65 {dimension_numbers = #tpu.dot_dimension_numbers<[1], [0], [0], [1], [0, 0, 1, 1], [], []>} : vector<16x16xf32>, vector<16x16xf32>, vector<16x16xf32> -> vector<16x16xf32>
    %164 = vector.extract_strided_slice %34 {offsets = [0, 112], sizes = [16, 16], strides = [1, 1]} : vector<16x128xf32> to vector<16x16xf32>
    %165 = vector.extract_strided_slice %39 {offsets = [0, 112], sizes = [16, 16], strides = [1, 1]} : vector<16x128xf32> to vector<16x16xf32>
    %166 = vector.extract_strided_slice %44 {offsets = [0, 112], sizes = [16, 16], strides = [1, 1]} : vector<16x128xf32> to vector<16x16xf32>
    %167 = tpu.transpose %165, [1, 0] : vector<16x16xf32> -> vector<16x16xf32>
    %cst_66 = arith.constant dense<0.000000e+00> : vector<16x16xf32>
    %168 = tpu.matmul %164, %167, %cst_66 {dimension_numbers = #tpu.dot_dimension_numbers<[1], [0], [0], [1], [0, 0, 1, 1], [], []>} : vector<16x16xf32>, vector<16x16xf32>, vector<16x16xf32> -> vector<16x16xf32>
    %cst_67 = arith.constant 2.500000e-01 : f32
    %169 = vector.broadcast %cst_67 : f32 to vector<16x16xf32>
    %170 = arith.mulf %168, %169 : vector<16x16xf32>
    %cst_68 = arith.constant dense<0xFF800000> : vector<16xf32>
    %171 = vector.multi_reduction <maximumf>, %170, %cst_68 [1] : vector<16x16xf32> to vector<16xf32>
    %172 = vector.shape_cast %171 : vector<16xf32> to vector<16x1xf32>
    %173 = vector.broadcast %172 : vector<16x1xf32> to vector<16x16xf32>
    %174 = arith.subf %170, %173 : vector<16x16xf32>
    %175 = math.exp %174 : vector<16x16xf32>
    %cst_69 = arith.constant dense<0.000000e+00> : vector<16xf32>
    %176 = vector.multi_reduction <add>, %175, %cst_69 [1] : vector<16x16xf32> to vector<16xf32>
    %177 = vector.shape_cast %176 : vector<16xf32> to vector<16x1xf32>
    %178 = vector.broadcast %177 : vector<16x1xf32> to vector<16x16xf32>
    %179 = arith.divf %175, %178 : vector<16x16xf32>
    %cst_70 = arith.constant dense<0.000000e+00> : vector<16x16xf32>
    %180 = tpu.matmul %179, %166, %cst_70 {dimension_numbers = #tpu.dot_dimension_numbers<[1], [0], [0], [1], [0, 0, 1, 1], [], []>} : vector<16x16xf32>, vector<16x16xf32>, vector<16x16xf32> -> vector<16x16xf32>
    %181 = tpu.concatenate %61, %78, %95, %112, %129, %146, %163, %180 in 1 : vector<16x16xf32>, vector<16x16xf32>, vector<16x16xf32>, vector<16x16xf32>, vector<16x16xf32>, vector<16x16xf32>, vector<16x16xf32>, vector<16x16xf32> -> vector<16x128xf32>
    %cst_71 = arith.constant dense<0.000000e+00> : vector<16xf32>
    %182 = vector.multi_reduction <add>, %181, %cst_71 [1] : vector<16x128xf32> to vector<16xf32>
    %183 = vector.shape_cast %182 : vector<16xf32> to vector<16x1xf32>
    %cst_72 = arith.constant 1.280000e+02 : f32
    %184 = vector.broadcast %cst_72 : f32 to vector<16x1xf32>
    %185 = arith.divf %183, %184 : vector<16x1xf32>
    %186 = vector.broadcast %185 : vector<16x1xf32> to vector<16x128xf32>
    %187 = arith.subf %181, %186 : vector<16x128xf32>
    %188 = arith.mulf %187, %187 : vector<16x128xf32>
    %cst_73 = arith.constant dense<0.000000e+00> : vector<16xf32>
    %189 = vector.multi_reduction <add>, %188, %cst_73 [1] : vector<16x128xf32> to vector<16xf32>
    %190 = vector.shape_cast %189 : vector<16xf32> to vector<16x1xf32>
    %cst_74 = arith.constant 1.280000e+02 : f32
    %191 = vector.broadcast %cst_74 : f32 to vector<16x1xf32>
    %192 = arith.divf %190, %191 : vector<16x1xf32>
    %cst_75 = arith.constant 9.99999974E-6 : f32
    %193 = vector.broadcast %cst_75 : f32 to vector<16x1xf32>
    %194 = arith.addf %192, %193 : vector<16x1xf32>
    %195 = math.rsqrt %194 : vector<16x1xf32>
    %196 = vector.broadcast %195 : vector<16x1xf32> to vector<16x128xf32>
    %197 = arith.mulf %187, %196 : vector<16x128xf32>
    %c0_76 = arith.constant 0 : index
    %c0_77 = arith.constant 0 : index
    %198 = vector.load %arg12[%c0_76, %c0_77] : memref<1x128xf32, #tpu.memory_space<vmem>>, vector<1x128xf32>
    %199 = vector.broadcast %198 : vector<1x128xf32> to vector<16x128xf32>
    %200 = arith.mulf %197, %199 : vector<16x128xf32>
    %c0_78 = arith.constant 0 : index
    %c0_79 = arith.constant 0 : index
    %201 = vector.load %arg13[%c0_78, %c0_79] : memref<1x128xf32, #tpu.memory_space<vmem>>, vector<1x128xf32>
    %202 = vector.broadcast %201 : vector<1x128xf32> to vector<16x128xf32>
    %203 = arith.addf %200, %202 : vector<16x128xf32>
    %c0_80 = arith.constant 0 : index
    %c0_81 = arith.constant 0 : index
    %204 = vector.load %arg14[%c0_80, %c0_81] : memref<128x64xf32, #tpu.memory_space<vmem>>, vector<128x64xf32>
    %cst_82 = arith.constant dense<0.000000e+00> : vector<16x64xf32>
    %205 = tpu.matmul %203, %204, %cst_82 {dimension_numbers = #tpu.dot_dimension_numbers<[1], [0], [0], [1], [0, 0, 1, 1], [], []>} : vector<16x128xf32>, vector<128x64xf32>, vector<16x64xf32> -> vector<16x64xf32>
    %c0_83 = arith.constant 0 : index
    %c0_84 = arith.constant 0 : index
    %206 = vector.load %arg15[%c0_83, %c0_84] : memref<1x64xf32, #tpu.memory_space<vmem>>, vector<1x64xf32>
    %207 = vector.broadcast %206 : vector<1x64xf32> to vector<16x64xf32>
    %208 = arith.addf %205, %207 : vector<16x64xf32>
    %cst_85 = arith.constant 0.000000e+00 : f32
    %209 = vector.broadcast %cst_85 : f32 to vector<16x64xf32>
    %210 = arith.maximumf %208, %209 : vector<16x64xf32>
    %c0_86 = arith.constant 0 : index
    %c0_87 = arith.constant 0 : index
    %211 = vector.load %arg16[%c0_86, %c0_87] : memref<64x128xf32, #tpu.memory_space<vmem>>, vector<64x128xf32>
    %cst_88 = arith.constant dense<0.000000e+00> : vector<16x128xf32>
    %212 = tpu.matmul %210, %211, %cst_88 {dimension_numbers = #tpu.dot_dimension_numbers<[1], [0], [0], [1], [0, 0, 1, 1], [], []>} : vector<16x64xf32>, vector<64x128xf32>, vector<16x128xf32> -> vector<16x128xf32>
    %c0_89 = arith.constant 0 : index
    %c0_90 = arith.constant 0 : index
    %213 = vector.load %arg17[%c0_89, %c0_90] : memref<1x128xf32, #tpu.memory_space<vmem>>, vector<1x128xf32>
    %214 = vector.broadcast %213 : vector<1x128xf32> to vector<16x128xf32>
    %215 = arith.addf %212, %214 : vector<16x128xf32>
    %216 = arith.addf %181, %215 : vector<16x128xf32>
    %cst_91 = arith.constant dense<0.000000e+00> : vector<16xf32>
    %217 = vector.multi_reduction <add>, %216, %cst_91 [1] : vector<16x128xf32> to vector<16xf32>
    %218 = vector.shape_cast %217 : vector<16xf32> to vector<16x1xf32>
    %cst_92 = arith.constant 1.280000e+02 : f32
    %219 = vector.broadcast %cst_92 : f32 to vector<16x1xf32>
    %220 = arith.divf %218, %219 : vector<16x1xf32>
    %221 = vector.broadcast %220 : vector<16x1xf32> to vector<16x128xf32>
    %222 = arith.subf %216, %221 : vector<16x128xf32>
    %223 = arith.mulf %222, %222 : vector<16x128xf32>
    %cst_93 = arith.constant dense<0.000000e+00> : vector<16xf32>
    %224 = vector.multi_reduction <add>, %223, %cst_93 [1] : vector<16x128xf32> to vector<16xf32>
    %225 = vector.shape_cast %224 : vector<16xf32> to vector<16x1xf32>
    %cst_94 = arith.constant 1.280000e+02 : f32
    %226 = vector.broadcast %cst_94 : f32 to vector<16x1xf32>
    %227 = arith.divf %225, %226 : vector<16x1xf32>
    %cst_95 = arith.constant 9.99999974E-6 : f32
    %228 = vector.broadcast %cst_95 : f32 to vector<16x1xf32>
    %229 = arith.addf %227, %228 : vector<16x1xf32>
    %230 = math.rsqrt %229 : vector<16x1xf32>
    %231 = vector.broadcast %230 : vector<16x1xf32> to vector<16x128xf32>
    %232 = arith.mulf %222, %231 : vector<16x128xf32>
    %c0_96 = arith.constant 0 : index
    %c0_97 = arith.constant 0 : index
    %c0_98 = arith.constant 0 : index
    %233 = vector.load %arg18[%c0_96, %c0_97, %c0_98] : memref<1x16x128xf32, #tpu.memory_space<vmem>>, vector<1x16x128xf32>
    %234 = vector.shape_cast %233 : vector<1x16x128xf32> to vector<16x128xf32>
    %235 = vector.shape_cast %232 : vector<16x128xf32> to vector<1x16x128xf32>
    tpu.vector_store %arg18[%c0_96, %c0_97, %c0_98], %235 {strides = array<i32>} : memref<1x16x128xf32, #tpu.memory_space<vmem>>, vector<1x16x128xf32>,
    return
  }
  func.func @transform_0(%arg0: i32) -> (i32, i32, i32) {
    %c0_i32 = arith.constant 0 : i32
    %c0_i32_0 = arith.constant 0 : i32
    %c0_i32_1 = arith.constant 0 : i32
    return %arg0, %c0_i32, %c0_i32_0 : i32, i32, i32
  }
  func.func @transform_1(%arg0: i32) -> (i32, i32, i32) {
    %c0_i32 = arith.constant 0 : i32
    %c0_i32_0 = arith.constant 0 : i32
    %c0_i32_1 = arith.constant 0 : i32
    return %arg0, %c0_i32, %c0_i32_0 : i32, i32, i32
  }
  func.func @transform_2(%arg0: i32) -> (i32, i32) {
    %c0_i32 = arith.constant 0 : i32
    %c0_i32_0 = arith.constant 0 : i32
    %c0_i32_1 = arith.constant 0 : i32
    return %c0_i32, %c0_i32_0 : i32, i32
  }
  func.func @transform_3(%arg0: i32) -> (i32, i32) {
    %c0_i32 = arith.constant 0 : i32
    %c0_i32_0 = arith.constant 0 : i32
    %c0_i32_1 = arith.constant 0 : i32
    return %c0_i32, %c0_i32_0 : i32, i32
  }
  func.func @transform_4(%arg0: i32) -> (i32, i32) {
    %c0_i32 = arith.constant 0 : i32
    %c0_i32_0 = arith.constant 0 : i32
    %c0_i32_1 = arith.constant 0 : i32
    return %c0_i32, %c0_i32_0 : i32, i32
  }
  func.func @transform_5(%arg0: i32) -> (i32, i32) {
    %c0_i32 = arith.constant 0 : i32
    %c0_i32_0 = arith.constant 0 : i32
    %c0_i32_1 = arith.constant 0 : i32
    return %c0_i32, %c0_i32_0 : i32, i32
  }
  func.func @transform_6(%arg0: i32) -> (i32, i32) {
    %c0_i32 = arith.constant 0 : i32
    %c0_i32_0 = arith.constant 0 : i32
    %c0_i32_1 = arith.constant 0 : i32
    return %c0_i32, %c0_i32_0 : i32, i32
  }
  func.func @transform_7(%arg0: i32) -> (i32, i32) {
    %c0_i32 = arith.constant 0 : i32
    %c0_i32_0 = arith.constant 0 : i32
    %c0_i32_1 = arith.constant 0 : i32
    return %c0_i32, %c0_i32_0 : i32, i32
  }
  func.func @transform_8(%arg0: i32) -> (i32, i32) {
    %c0_i32 = arith.constant 0 : i32
    %c0_i32_0 = arith.constant 0 : i32
    %c0_i32_1 = arith.constant 0 : i32
    return %c0_i32, %c0_i32_0 : i32, i32
  }
  func.func @transform_9(%arg0: i32) -> (i32, i32) {
    %c0_i32 = arith.constant 0 : i32
    %c0_i32_0 = arith.constant 0 : i32
    %c0_i32_1 = arith.constant 0 : i32
    return %c0_i32, %c0_i32_0 : i32, i32
  }
  func.func @transform_10(%arg0: i32) -> (i32, i32) {
    %c0_i32 = arith.constant 0 : i32
    %c0_i32_0 = arith.constant 0 : i32
    %c0_i32_1 = arith.constant 0 : i32
    return %c0_i32, %c0_i32_0 : i32, i32
  }
  func.func @transform_11(%arg0: i32) -> (i32, i32) {
    %c0_i32 = arith.constant 0 : i32
    %c0_i32_0 = arith.constant 0 : i32
    %c0_i32_1 = arith.constant 0 : i32
    return %c0_i32, %c0_i32_0 : i32, i32
  }
  func.func @transform_12(%arg0: i32) -> (i32, i32) {
    %c0_i32 = arith.constant 0 : i32
    %c0_i32_0 = arith.constant 0 : i32
    %c0_i32_1 = arith.constant 0 : i32
    return %c0_i32, %c0_i32_0 : i32, i32
  }
  func.func @transform_13(%arg0: i32) -> (i32, i32) {
    %c0_i32 = arith.constant 0 : i32
    %c0_i32_0 = arith.constant 0 : i32
    %c0_i32_1 = arith.constant 0 : i32
    return %c0_i32, %c0_i32_0 : i32, i32
  }
  func.func @transform_14(%arg0: i32) -> (i32, i32) {
    %c0_i32 = arith.constant 0 : i32
    %c0_i32_0 = arith.constant 0 : i32
    %c0_i32_1 = arith.constant 0 : i32
    return %c0_i32, %c0_i32_0 : i32, i32
  }
  func.func @transform_15(%arg0: i32) -> (i32, i32) {
    %c0_i32 = arith.constant 0 : i32
    %c0_i32_0 = arith.constant 0 : i32
    %c0_i32_1 = arith.constant 0 : i32
    return %c0_i32, %c0_i32_0 : i32, i32
  }
  func.func @transform_16(%arg0: i32) -> (i32, i32) {
    %c0_i32 = arith.constant 0 : i32
    %c0_i32_0 = arith.constant 0 : i32
    %c0_i32_1 = arith.constant 0 : i32
    return %c0_i32, %c0_i32_0 : i32, i32
  }
  func.func @transform_17(%arg0: i32) -> (i32, i32, i32) {
    %c0_i32 = arith.constant 0 : i32
    %c0_i32_0 = arith.constant 0 : i32
    %c0_i32_1 = arith.constant 0 : i32
    return %arg0, %c0_i32, %c0_i32_0 : i32, i32, i32
  }
}

</mosaic_0001>

<llo_original>
// kernel: tpu_custom_call.1
$region0: #{tpu_custom_call.1}
  #allocation0 [shape = 'u32[]', space=smem, size = 0x4, offset = 0x4, fixed_abs, tag = 'smem constant byte address 0x4 - core index']
  #allocation1 [shape = 'u32[72,128]{1,0:T(1,128)}', space=vmem, size = 0x9000, scoped, tag = 'internal scratch']
  %s0 = inlined_call_operand.hbm [shape: f32[2,16,128], index: 0, kind: input, shape index: {}]
  %s1 = inlined_call_operand.hbm [shape: f32[2,1,128], index: 1, kind: input, shape index: {}]
  %s2 = inlined_call_operand.vmem [shape: f32[128,128], index: 2, kind: input, shape index: {}]
  %s3 = inlined_call_operand.vmem [shape: f32[1,128], index: 3, kind: input, shape index: {}]
  %s4 = inlined_call_operand.vmem [shape: f32[1,128], index: 4, kind: input, shape index: {}]
  %s5 = inlined_call_operand.hbm [shape: f32[128,128], index: 5, kind: input, shape index: {}]
  %s6 = inlined_call_operand.vmem [shape: f32[1,128], index: 6, kind: input, shape index: {}]
  %s7 = inlined_call_operand.hbm [shape: f32[128,128], index: 7, kind: input, shape index: {}]
  %s8 = inlined_call_operand.vmem [shape: f32[1,128], index: 8, kind: input, shape index: {}]
  %s9 = inlined_call_operand.hbm [shape: f32[128,128], index: 9, kind: input, shape index: {}]
  %s10 = inlined_call_operand.vmem [shape: f32[1,128], index: 10, kind: input, shape index: {}]
  %s11 = inlined_call_operand.vmem [shape: f32[1,128], index: 11, kind: input, shape index: {}]
  %s12 = inlined_call_operand.vmem [shape: f32[1,128], index: 12, kind: input, shape index: {}]
  %s13 = inlined_call_operand.vmem [shape: f32[128,64], index: 13, kind: input, shape index: {}]
  %s14 = inlined_call_operand.vmem [shape: f32[1,64], index: 14, kind: input, shape index: {}]
  %s15 = inlined_call_operand.vmem [shape: f32[64,128], index: 15, kind: input, shape index: {}]
  %s16 = inlined_call_operand.vmem [shape: f32[1,128], index: 16, kind: input, shape index: {}]
  %s17 = inlined_call_operand.hbm [shape: f32[2,16,128], index: 17, kind: output, shape index: {}]
  %s18 = sld [smem:[#allocation0]]
  $region121: #{tpu_custom_call.1} parent=0
    _
  %s20 = ssub.s32 1, %s18
  %s21 = scalar_select 0, %s20, %s18
  $region1: #{tpu_custom_call.1} parent=0
    #allocation2 [shape = 'u8[16384]{0}', space=vmem, size = 0x4000, scoped, tag = 'input window, operand 0']
    #allocation3 [shape = 's32[2]{0}', space=sflag, size = 0x8, scoped, tag = 'scoped memory for tpu_custom_call.1']
    #allocation4 [shape = 's32[2]{0}', space=sflag, size = 0x8, scoped, tag = 'scoped memory for tpu_custom_call.1']
    #allocation5 [shape = 'u8[1024]{0}', space=vmem, size = 0x400, scoped, tag = 'input window, operand 1']
    #allocation6 [shape = 's32[2]{0}', space=sflag, size = 0x8, scoped, tag = 'scoped memory for tpu_custom_call.1']
    #allocation7 [shape = 'u8[65536]{0}', space=vmem, size = 0x10000, scoped, tag = 'input window, operand 5, single buffered']
    #allocation8 [shape = 'u8[65536]{0}', space=vmem, size = 0x10000, scoped, tag = 'input window, operand 7, single buffered']
    #allocation9 [shape = 's32[1]{0}', space=sflag, size = 0x4, scoped, tag = 'scoped memory for tpu_custom_call.1']
    #allocation10 [shape = 'u8[65536]{0}', space=vmem, size = 0x10000, scoped, tag = 'input window, operand 9, single buffered']
    #allocation11 [shape = 'u8[16384]{0}', space=vmem, size = 0x4000, scoped, tag = 'output window, operand 0']
    %22 = vsyncpa [#allocation3], 0
    %s23 = scalar_lea.sflag [#allocation3], 1
    %24 = vsyncpa %s23, 0
    %25 = vsyncpa [#allocation6], 0
    %s26 = scalar_lea.sflag [#allocation6], 1
    %27 = vsyncpa %s26, 0
    %28 = vsyncpa [#allocation9], 0
    %29 = vsyncpa [#allocation4], 0
    %s30 = scalar_lea.sflag [#allocation4], 1
    %31 = vsyncpa %s30, 0
    loop: start=0, step=1, limit=4
    $region2: #{tpu_custom_call.1} parent=1 // loop_pre_header
      _
    $region3: #{tpu_custom_call.1} parent=1 // loop_header
      %s33 = sphi 0, %s37
      %p34 = scmp.ge.s32.totalorder %s33, 4
      %s43 = sphi 0, %s45
      %s46 = sphi 0, %s43
      %s47 = sphi 0, %s46
      %s63 = sphi 0, %s47
      %s69 = sphi 0, %s71
      %s72 = sphi 0, %s69
      %s73 = sphi 0, %s72
      %s89 = sphi 0, %s73
      %s93 = sphi 0, %s93
      %s95 = sphi 0, %s93
      %s96 = sphi 0, %s95
      %s110 = sphi 0, %s96
      %s114 = sphi 0, %s114
      %s116 = sphi 0, %s114
      %s117 = sphi 0, %s116
      %s131 = sphi 0, %s117
      %s135 = sphi 0, %s135
      %s137 = sphi 0, %s135
      %s138 = sphi 0, %s137
      %s152 = sphi 0, %s138
      %s156 = sphi 0, %s156
      %s158 = sphi 0, %s156
      %s159 = sphi 0, %s158
      %s173 = sphi 0, %s159
      %s177 = sphi 0, %s177
      %s179 = sphi 0, %s177
      %s180 = sphi 0, %s179
      %s194 = sphi 0, %s180
      %s198 = sphi 0, %s198
      %s200 = sphi 0, %s198
      %s201 = sphi 0, %s200
      %s215 = sphi 0, %s201
      %s219 = sphi 0, %s219
      %s221 = sphi 0, %s219
      %s222 = sphi 0, %s221
      %s236 = sphi 0, %s222
      %s240 = sphi 0, %s240
      %s242 = sphi 0, %s240
      %s243 = sphi 0, %s242
      %s257 = sphi 0, %s243
      %s261 = sphi 0, %s261
      %s263 = sphi 0, %s261
      %s264 = sphi 0, %s263
      %s278 = sphi 0, %s264
      %s282 = sphi 0, %s282
      %s284 = sphi 0, %s282
      %s285 = sphi 0, %s284
      %s299 = sphi 0, %s285
      %s303 = sphi 0, %s303
      %s305 = sphi 0, %s303
      %s306 = sphi 0, %s305
      %s320 = sphi 0, %s306
      %s324 = sphi 0, %s324
      %s326 = sphi 0, %s324
      %s327 = sphi 0, %s326
      %s341 = sphi 0, %s327
      %s345 = sphi 0, %s345
      %s347 = sphi 0, %s345
      %s348 = sphi 0, %s347
      %s362 = sphi 0, %s348
      %s366 = sphi 0, %s366
      %s368 = sphi 0, %s366
      %s369 = sphi 0, %s368
      %s383 = sphi 0, %s369
      %s387 = sphi 0, %s387
      %s389 = sphi 0, %s387
      %s390 = sphi 0, %s389
      %s404 = sphi 0, %s390
      %s410 = sphi 0, %s412
      %s413 = sphi 0, %s410
      %s414 = sphi 0, %s413
      %s430 = sphi 0, %s414
    $region4: #{tpu_custom_call.1} parent=1 // loop_header_branch
      %36 = sbr.rel (%p34) target = $region8
    $region5: #{tpu_custom_call.1} parent=1 // loop_body
      %s38 = ssub.s32 %s33, 1
      %s39 = ssub.s32 %s33, 2
      %s40 = sadd.s32 %s33, 1
      %s41 = ssub.s32 %s33, %s40
      %p42 = scmp.eq.s32.totalorder %s41, 0
      %s44 = sadd.s32 %s43, 1
      %s45 = scalar_select %p42, %s43, %s44
      %p48 = pneg %p42
      %p49 = scmp.eq.s32.totalorder %s33, 1
      %p50 = por %p48, %p49
      %p51 = scmp.ne.s32.totalorder %s43, %s46
      %p52 = scmp.eq.s32.totalorder %s33, 0
      %p53 = por %p51, %p52
      %p54 = scmp.ne.s32.totalorder %s43, %s46
      %p55 = scmp.eq.s32.totalorder %s38, 1
      %p56 = por %p54, %p55
      %p57 = scmp.ne.s32.totalorder %s46, %s47
      %p58 = scmp.eq.s32.totalorder %s38, 0
      %p59 = por %p57, %p58
      %p60 = scmp.ne.s32.totalorder %s46, %s47
      %p61 = scmp.eq.s32.totalorder %s39, 1
      %p62 = por %p60, %p61
      %p64 = scmp.ne.s32.totalorder %s47, %s63
      %p65 = scmp.eq.s32.totalorder %s39, 0
      %p66 = por %p64, %p65
      %s67 = ssub.s32 %s33, %s40
      %p68 = scmp.eq.s32.totalorder %s67, 0
      %s70 = sadd.s32 %s69, 1
      %s71 = scalar_select %p68, %s69, %s70
      %p74 = pneg %p68
      %p75 = scmp.eq.s32.totalorder %s33, 1
      %p76 = por %p74, %p75
      %p77 = scmp.ne.s32.totalorder %s69, %s72
      %p78 = scmp.eq.s32.totalorder %s33, 0
      %p79 = por %p77, %p78
      %p80 = scmp.ne.s32.totalorder %s69, %s72
      %p81 = scmp.eq.s32.totalorder %s38, 1
      %p82 = por %p80, %p81
      %p83 = scmp.ne.s32.totalorder %s72, %s73
      %p84 = scmp.eq.s32.totalorder %s38, 0
      %p85 = por %p83, %p84
      %p86 = scmp.ne.s32.totalorder %s72, %s73
      %p87 = scmp.eq.s32.totalorder %s39, 1
      %p88 = por %p86, %p87
      %p90 = scmp.ne.s32.totalorder %s73, %s89
      %p91 = scmp.eq.s32.totalorder %s39, 0
      %p92 = por %p90, %p91
      %s94 = sadd.s32 %s93, 1
      %p97 = scmp.eq.s32.totalorder %s33, 1
      %p98 = scmp.ne.s32.totalorder %s93, %s95
      %p99 = scmp.eq.s32.totalorder %s33, 0
      %p100 = por %p98, %p99
      %p101 = scmp.ne.s32.totalorder %s93, %s95
      %p102 = scmp.eq.s32.totalorder %s38, 1
      %p103 = por %p101, %p102
      %p104 = scmp.ne.s32.totalorder %s95, %s96
      %p105 = scmp.eq.s32.totalorder %s38, 0
      %p106 = por %p104, %p105
      %p107 = scmp.ne.s32.totalorder %s95, %s96
      %p108 = scmp.eq.s32.totalorder %s39, 1
      %p109 = por %p107, %p108
      %p111 = scmp.ne.s32.totalorder %s96, %s110
      %p112 = scmp.eq.s32.totalorder %s39, 0
      %p113 = por %p111, %p112
      %s115 = sadd.s32 %s114, 1
      %p118 = scmp.eq.s32.totalorder %s33, 1
      %p119 = scmp.ne.s32.totalorder %s114, %s116
      %p120 = scmp.eq.s32.totalorder %s33, 0
      %p121 = por %p119, %p120
      %p122 = scmp.ne.s32.totalorder %s114, %s116
      %p123 = scmp.eq.s32.totalorder %s38, 1
      %p124 = por %p122, %p123
      %p125 = scmp.ne.s32.totalorder %s116, %s117
      %p126 = scmp.eq.s32.totalorder %s38, 0
      %p127 = por %p125, %p126
      %p128 = scmp.ne.s32.totalorder %s116, %s117
      %p129 = scmp.eq.s32.totalorder %s39, 1
      %p130 = por %p128, %p129
      %p132 = scmp.ne.s32.totalorder %s117, %s131
      %p133 = scmp.eq.s32.totalorder %s39, 0
      %p134 = por %p132, %p133
      %s136 = sadd.s32 %s135, 1
      %p139 = scmp.eq.s32.totalorder %s33, 1
      %p140 = scmp.ne.s32.totalorder %s135, %s137
      %p141 = scmp.eq.s32.totalorder %s33, 0
      %p142 = por %p140, %p141
      %p143 = scmp.ne.s32.totalorder %s135, %s137
      %p144 = scmp.eq.s32.totalorder %s38, 1
      %p145 = por %p143, %p144
      %p146 = scmp.ne.s32.totalorder %s137, %s138
      %p147 = scmp.eq.s32.totalorder %s38, 0
      %p148 = por %p146, %p147
      %p149 = scmp.ne.s32.totalorder %s137, %s138
      %p150 = scmp.eq.s32.totalorder %s39, 1
      %p151 = por %p149, %p150
      %p153 = scmp.ne.s32.totalorder %s138, %s152
      %p154 = scmp.eq.s32.totalorder %s39, 0
      %p155 = por %p153, %p154
      %s157 = sadd.s32 %s156, 1
      %p160 = scmp.eq.s32.totalorder %s33, 1
      %p161 = scmp.ne.s32.totalorder %s156, %s158
      %p162 = scmp.eq.s32.totalorder %s33, 0
      %p163 = por %p161, %p162
      %p164 = scmp.ne.s32.totalorder %s156, %s158
      %p165 = scmp.eq.s32.totalorder %s38, 1
      %p166 = por %p164, %p165
      %p167 = scmp.ne.s32.totalorder %s158, %s159
      %p168 = scmp.eq.s32.totalorder %s38, 0
      %p169 = por %p167, %p168
      %p170 = scmp.ne.s32.totalorder %s158, %s159
      %p171 = scmp.eq.s32.totalorder %s39, 1
      %p172 = por %p170, %p171
      %p174 = scmp.ne.s32.totalorder %s159, %s173
      %p175 = scmp.eq.s32.totalorder %s39, 0
      %p176 = por %p174, %p175
      %s178 = sadd.s32 %s177, 1
      %p181 = scmp.eq.s32.totalorder %s33, 1
      %p182 = scmp.ne.s32.totalorder %s177, %s179
      %p183 = scmp.eq.s32.totalorder %s33, 0
      %p184 = por %p182, %p183
      %p185 = scmp.ne.s32.totalorder %s177, %s179
      %p186 = scmp.eq.s32.totalorder %s38, 1
      %p187 = por %p185, %p186
      %p188 = scmp.ne.s32.totalorder %s179, %s180
      %p189 = scmp.eq.s32.totalorder %s38, 0
      %p190 = por %p188, %p189
      %p191 = scmp.ne.s32.totalorder %s179, %s180
      %p192 = scmp.eq.s32.totalorder %s39, 1
      %p193 = por %p191, %p192
      %p195 = scmp.ne.s32.totalorder %s180, %s194
      %p196 = scmp.eq.s32.totalorder %s39, 0
      %p197 = por %p195, %p196
      %s199 = sadd.s32 %s198, 1
      %p202 = scmp.eq.s32.totalorder %s33, 1
      %p203 = scmp.ne.s32.totalorder %s198, %s200
      %p204 = scmp.eq.s32.totalorder %s33, 0
      %p205 = por %p203, %p204
      %p206 = scmp.ne.s32.totalorder %s198, %s200
      %p207 = scmp.eq.s32.totalorder %s38, 1
      %p208 = por %p206, %p207
      %p209 = scmp.ne.s32.totalorder %s200, %s201
      %p210 = scmp.eq.s32.totalorder %s38, 0
      %p211 = por %p209, %p210
      %p212 = scmp.ne.s32.totalorder %s200, %s201
      %p213 = scmp.eq.s32.totalorder %s39, 1
      %p214 = por %p212, %p213
      %p216 = scmp.ne.s32.totalorder %s201, %s215
      %p217 = scmp.eq.s32.totalorder %s39, 0
      %p218 = por %p216, %p217
      %s220 = sadd.s32 %s219, 1
      %p223 = scmp.eq.s32.totalorder %s33, 1
      %p224 = scmp.ne.s32.totalorder %s219, %s221
      %p225 = scmp.eq.s32.totalorder %s33, 0
      %p226 = por %p224, %p225
      %p227 = scmp.ne.s32.totalorder %s219, %s221
      %p228 = scmp.eq.s32.totalorder %s38, 1
      %p229 = por %p227, %p228
      %p230 = scmp.ne.s32.totalorder %s221, %s222
      %p231 = scmp.eq.s32.totalorder %s38, 0
      %p232 = por %p230, %p231
      %p233 = scmp.ne.s32.totalorder %s221, %s222
      %p234 = scmp.eq.s32.totalorder %s39, 1
      %p235 = por %p233, %p234
      %p237 = scmp.ne.s32.totalorder %s222, %s236
      %p238 = scmp.eq.s32.totalorder %s39, 0
      %p239 = por %p237, %p238
      %s241 = sadd.s32 %s240, 1
      %p244 = scmp.eq.s32.totalorder %s33, 1
      %p245 = scmp.ne.s32.totalorder %s240, %s242
      %p246 = scmp.eq.s32.totalorder %s33, 0
      %p247 = por %p245, %p246
      %p248 = scmp.ne.s32.totalorder %s240, %s242
      %p249 = scmp.eq.s32.totalorder %s38, 1
      %p250 = por %p248, %p249
      %p251 = scmp.ne.s32.totalorder %s242, %s243
      %p252 = scmp.eq.s32.totalorder %s38, 0
      %p253 = por %p251, %p252
      %p254 = scmp.ne.s32.totalorder %s242, %s243
      %p255 = scmp.eq.s32.totalorder %s39, 1
      %p256 = por %p254, %p255
      %p258 = scmp.ne.s32.totalorder %s243, %s257
      %p259 = scmp.eq.s32.totalorder %s39, 0
      %p260 = por %p258, %p259
      %s262 = sadd.s32 %s261, 1
      %p265 = scmp.eq.s32.totalorder %s33, 1
      %p266 = scmp.ne.s32.totalorder %s261, %s263
      %p267 = scmp.eq.s32.totalorder %s33, 0
      %p268 = por %p266, %p267
      %p269 = scmp.ne.s32.totalorder %s261, %s263
      %p270 = scmp.eq.s32.totalorder %s38, 1
      %p271 = por %p269, %p270
      %p272 = scmp.ne.s32.totalorder %s263, %s264
      %p273 = scmp.eq.s32.totalorder %s38, 0
      %p274 = por %p272, %p273
      %p275 = scmp.ne.s32.totalorder %s263, %s264
      %p276 = scmp.eq.s32.totalorder %s39, 1
      %p277 = por %p275, %p276
      %p279 = scmp.ne.s32.totalorder %s264, %s278
      %p280 = scmp.eq.s32.totalorder %s39, 0
      %p281 = por %p279, %p280
      %s283 = sadd.s32 %s282, 1
      %p286 = scmp.eq.s32.totalorder %s33, 1
      %p287 = scmp.ne.s32.totalorder %s282, %s284
      %p288 = scmp.eq.s32.totalorder %s33, 0
      %p289 = por %p287, %p288
      %p290 = scmp.ne.s32.totalorder %s282, %s284
      %p291 = scmp.eq.s32.totalorder %s38, 1
      %p292 = por %p290, %p291
      %p293 = scmp.ne.s32.totalorder %s284, %s285
      %p294 = scmp.eq.s32.totalorder %s38, 0
      %p295 = por %p293, %p294
      %p296 = scmp.ne.s32.totalorder %s284, %s285
      %p297 = scmp.eq.s32.totalorder %s39, 1
      %p298 = por %p296, %p297
      %p300 = scmp.ne.s32.totalorder %s285, %s299
      %p301 = scmp.eq.s32.totalorder %s39, 0
      %p302 = por %p300, %p301
      %s304 = sadd.s32 %s303, 1
      %p307 = scmp.eq.s32.totalorder %s33, 1
      %p308 = scmp.ne.s32.totalorder %s303, %s305
      %p309 = scmp.eq.s32.totalorder %s33, 0
      %p310 = por %p308, %p309
      %p311 = scmp.ne.s32.totalorder %s303, %s305
      %p312 = scmp.eq.s32.totalorder %s38, 1
      %p313 = por %p311, %p312
      %p314 = scmp.ne.s32.totalorder %s305, %s306
      %p315 = scmp.eq.s32.totalorder %s38, 0
      %p316 = por %p314, %p315
      %p317 = scmp.ne.s32.totalorder %s305, %s306
      %p318 = scmp.eq.s32.totalorder %s39, 1
      %p319 = por %p317, %p318
      %p321 = scmp.ne.s32.totalorder %s306, %s320
      %p322 = scmp.eq.s32.totalorder %s39, 0
      %p323 = por %p321, %p322
      %s325 = sadd.s32 %s324, 1
      %p328 = scmp.eq.s32.totalorder %s33, 1
      %p329 = scmp.ne.s32.totalorder %s324, %s326
      %p330 = scmp.eq.s32.totalorder %s33, 0
      %p331 = por %p329, %p330
      %p332 = scmp.ne.s32.totalorder %s324, %s326
      %p333 = scmp.eq.s32.totalorder %s38, 1
      %p334 = por %p332, %p333
      %p335 = scmp.ne.s32.totalorder %s326, %s327
      %p336 = scmp.eq.s32.totalorder %s38, 0
      %p337 = por %p335, %p336
      %p338 = scmp.ne.s32.totalorder %s326, %s327
      %p339 = scmp.eq.s32.totalorder %s39, 1
      %p340 = por %p338, %p339
      %p342 = scmp.ne.s32.totalorder %s327, %s341
      %p343 = scmp.eq.s32.totalorder %s39, 0
      %p344 = por %p342, %p343
      %s346 = sadd.s32 %s345, 1
      %p349 = scmp.eq.s32.totalorder %s33, 1
      %p350 = scmp.ne.s32.totalorder %s345, %s347
      %p351 = scmp.eq.s32.totalorder %s33, 0
      %p352 = por %p350, %p351
      %p353 = scmp.ne.s32.totalorder %s345, %s347
      %p354 = scmp.eq.s32.totalorder %s38, 1
      %p355 = por %p353, %p354
      %p356 = scmp.ne.s32.totalorder %s347, %s348
      %p357 = scmp.eq.s32.totalorder %s38, 0
      %p358 = por %p356, %p357
      %p359 = scmp.ne.s32.totalorder %s347, %s348
      %p360 = scmp.eq.s32.totalorder %s39, 1
      %p361 = por %p359, %p360
      %p363 = scmp.ne.s32.totalorder %s348, %s362
      %p364 = scmp.eq.s32.totalorder %s39, 0
      %p365 = por %p363, %p364
      %s367 = sadd.s32 %s366, 1
      %p370 = scmp.eq.s32.totalorder %s33, 1
      %p371 = scmp.ne.s32.totalorder %s366, %s368
      %p372 = scmp.eq.s32.totalorder %s33, 0
      %p373 = por %p371, %p372
      %p374 = scmp.ne.s32.totalorder %s366, %s368
      %p375 = scmp.eq.s32.totalorder %s38, 1
      %p376 = por %p374, %p375
      %p377 = scmp.ne.s32.totalorder %s368, %s369
      %p378 = scmp.eq.s32.totalorder %s38, 0
      %p379 = por %p377, %p378
      %p380 = scmp.ne.s32.totalorder %s368, %s369
      %p381 = scmp.eq.s32.totalorder %s39, 1
      %p382 = por %p380, %p381
      %p384 = scmp.ne.s32.totalorder %s369, %s383
      %p385 = scmp.eq.s32.totalorder %s39, 0
      %p386 = por %p384, %p385
      %s388 = sadd.s32 %s387, 1
      %p391 = scmp.eq.s32.totalorder %s33, 1
      %p392 = scmp.ne.s32.totalorder %s387, %s389
      %p393 = scmp.eq.s32.totalorder %s33, 0
      %p394 = por %p392, %p393
      %p395 = scmp.ne.s32.totalorder %s387, %s389
      %p396 = scmp.eq.s32.totalorder %s38, 1
      %p397 = por %p395, %p396
      %p398 = scmp.ne.s32.totalorder %s389, %s390
      %p399 = scmp.eq.s32.totalorder %s38, 0
      %p400 = por %p398, %p399
      %p401 = scmp.ne.s32.totalorder %s389, %s390
      %p402 = scmp.eq.s32.totalorder %s39, 1
      %p403 = por %p401, %p402
      %p405 = scmp.ne.s32.totalorder %s390, %s404
      %p406 = scmp.eq.s32.totalorder %s39, 0
      %p407 = por %p405, %p406
      %s408 = ssub.s32 %s33, %s40
      %p409 = scmp.eq.s32.totalorder %s408, 0
      %s411 = sadd.s32 %s410, 1
      %s412 = scalar_select %p409, %s410, %s411
      %p415 = pneg %p409
      %p416 = scmp.eq.s32.totalorder %s33, 1
      %p417 = por %p415, %p416
      %p418 = scmp.ne.s32.totalorder %s410, %s413
      %p419 = scmp.eq.s32.totalorder %s33, 0
      %p420 = por %p418, %p419
      %p421 = scmp.ne.s32.totalorder %s410, %s413
      %p422 = scmp.eq.s32.totalorder %s38, 1
      %p423 = por %p421, %p422
      %p424 = scmp.ne.s32.totalorder %s413, %s414
      %p425 = scmp.eq.s32.totalorder %s38, 0
      %p426 = por %p424, %p425
      %p427 = scmp.ne.s32.totalorder %s413, %s414
      %p428 = scmp.eq.s32.totalorder %s39, 1
      %p429 = por %p427, %p428
      %p431 = scmp.ne.s32.totalorder %s414, %s430
      %p432 = scmp.eq.s32.totalorder %s39, 0
      %p433 = por %p431, %p432
      %p434 = scmp.le.s32.totalorder 1, %s33
      %p435 = scmp.lt.s32.totalorder %s33, 3
      %p436 = pnand %p434, %p435
      %p437 = pneg %p436
      // Predicated region
      $region9: #{tpu_custom_call.1} parent=5 // pred_check
        _
      $region10: #{tpu_custom_call.1} parent=5 // pred_check_branch
        %439 = sbr.rel (%p436) target = $region12
      $region11: #{tpu_custom_call.1} parent=5 // pred_region
        %s440 = ssub.s32 %s33, 1
        // Predicated region
        $region13: #{tpu_custom_call.1} parent=11 // pred_check
          %p441 = pneg %p106
        $region14: #{tpu_custom_call.1} parent=11 // pred_check_branch
          %443 = sbr.rel (%p441) target = $region16
        $region15: #{tpu_custom_call.1} parent=11 // pred_region
          _
        $region16: #{tpu_custom_call.1} parent=11 // pred_fallthru
          _
        // Predicated region
        $region17: #{tpu_custom_call.1} parent=11 // pred_check
          %p444 = pneg %p127
        $region18: #{tpu_custom_call.1} parent=11 // pred_check_branch
          %446 = sbr.rel (%p444) target = $region20
        $region19: #{tpu_custom_call.1} parent=11 // pred_region
          _
        $region20: #{tpu_custom_call.1} parent=11 // pred_fallthru
          _
        // Predicated region
        $region21: #{tpu_custom_call.1} parent=11 // pred_check
          %p447 = pneg %p148
        $region22: #{tpu_custom_call.1} parent=11 // pred_check_branch
          %449 = sbr.rel (%p447) target = $region24
        $region23: #{tpu_custom_call.1} parent=11 // pred_region
          _
        $region24: #{tpu_custom_call.1} parent=11 // pred_fallthru
          _
        // Predicated region
        $region25: #{tpu_custom_call.1} parent=11 // pred_check
          %p450 = pneg %p169
        $region26: #{tpu_custom_call.1} parent=11 // pred_check_branch
          %452 = sbr.rel (%p450) target = $region28
        $region27: #{tpu_custom_call.1} parent=11 // pred_region
          %454 = vsyncadd [#allocation6], 0
          %s455 = sshll.u32 %s5, 4
          %s456 = int_to_ptr.hbm [resolvable:$true] %s455
          %s457 = sshll.u32 [#allocation7], 4
          %s458 = int_to_ptr.vmem [resolvable:$true] %s457
          %463 = dma.hbm_to_vmem [thread:$0]  %s456, 2048, %s458, [#allocation6], 128, 128, 8
        $region28: #{tpu_custom_call.1} parent=11 // pred_fallthru
          _
        // Predicated region
        $region29: #{tpu_custom_call.1} parent=11 // pred_check
          %p464 = pneg %p190
        $region30: #{tpu_custom_call.1} parent=11 // pred_check_branch
          %466 = sbr.rel (%p464) target = $region32
        $region31: #{tpu_custom_call.1} parent=11 // pred_region
          _
        $region32: #{tpu_custom_call.1} parent=11 // pred_fallthru
          _
        // Predicated region
        $region33: #{tpu_custom_call.1} parent=11 // pred_check
          %p467 = pneg %p211
        $region34: #{tpu_custom_call.1} parent=11 // pred_check_branch
          %469 = sbr.rel (%p467) target = $region36
        $region35: #{tpu_custom_call.1} parent=11 // pred_region
          %471 = vsyncadd [#allocation9], 0
          %s472 = sshll.u32 %s7, 4
          %s473 = int_to_ptr.hbm [resolvable:$true] %s472
          %s474 = sshll.u32 [#allocation8], 4
          %s475 = int_to_ptr.vmem [resolvable:$true] %s474
          %480 = dma.hbm_to_vmem [thread:$0]  %s473, 2048, %s475, [#allocation9], 128, 128, 8
        $region36: #{tpu_custom_call.1} parent=11 // pred_fallthru
          _
        // Predicated region
        $region37: #{tpu_custom_call.1} parent=11 // pred_check
          %p481 = pneg %p232
        $region38: #{tpu_custom_call.1} parent=11 // pred_check_branch
          %483 = sbr.rel (%p481) target = $region40
        $region39: #{tpu_custom_call.1} parent=11 // pred_region
          _
        $region40: #{tpu_custom_call.1} parent=11 // pred_fallthru
          _
        // Predicated region
        $region41: #{tpu_custom_call.1} parent=11 // pred_check
          %p484 = pneg %p253
        $region42: #{tpu_custom_call.1} parent=11 // pred_check_branch
          %486 = sbr.rel (%p484) target = $region44
        $region43: #{tpu_custom_call.1} parent=11 // pred_region
          %488 = vsyncadd [#allocation9], 0
          %s489 = sshll.u32 %s9, 4
          %s490 = int_to_ptr.hbm [resolvable:$true] %s489
          %s491 = sshll.u32 [#allocation10], 4
          %s492 = int_to_ptr.vmem [resolvable:$true] %s491
          %497 = dma.hbm_to_vmem [thread:$0]  %s490, 2048, %s492, [#allocation9], 128, 128, 8
        $region44: #{tpu_custom_call.1} parent=11 // pred_fallthru
          _
        // Predicated region
        $region45: #{tpu_custom_call.1} parent=11 // pred_check
          %p498 = pneg %p274
        $region46: #{tpu_custom_call.1} parent=11 // pred_check_branch
          %500 = sbr.rel (%p498) target = $region48
        $region47: #{tpu_custom_call.1} parent=11 // pred_region
          _
        $region48: #{tpu_custom_call.1} parent=11 // pred_fallthru
          _
        // Predicated region
        $region49: #{tpu_custom_call.1} parent=11 // pred_check
          %p501 = pneg %p295
        $region50: #{tpu_custom_call.1} parent=11 // pred_check_branch
          %503 = sbr.rel (%p501) target = $region52
        $region51: #{tpu_custom_call.1} parent=11 // pred_region
          _
        $region52: #{tpu_custom_call.1} parent=11 // pred_fallthru
          _
        // Predicated region
        $region53: #{tpu_custom_call.1} parent=11 // pred_check
          %p504 = pneg %p316
        $region54: #{tpu_custom_call.1} parent=11 // pred_check_branch
          %506 = sbr.rel (%p504) target = $region56
        $region55: #{tpu_custom_call.1} parent=11 // pred_region
          _
        $region56: #{tpu_custom_call.1} parent=11 // pred_fallthru
          _
        // Predicated region
        $region57: #{tpu_custom_call.1} parent=11 // pred_check
          %p507 = pneg %p337
        $region58: #{tpu_custom_call.1} parent=11 // pred_check_branch
          %509 = sbr.rel (%p507) target = $region60
        $region59: #{tpu_custom_call.1} parent=11 // pred_region
          _
        $region60: #{tpu_custom_call.1} parent=11 // pred_fallthru
          _
        // Predicated region
        $region61: #{tpu_custom_call.1} parent=11 // pred_check
          %p510 = pneg %p358
        $region62: #{tpu_custom_call.1} parent=11 // pred_check_branch
          %512 = sbr.rel (%p510) target = $region64
        $region63: #{tpu_custom_call.1} parent=11 // pred_region
          _
        $region64: #{tpu_custom_call.1} parent=11 // pred_fallthru
          _
        // Predicated region
        $region65: #{tpu_custom_call.1} parent=11 // pred_check
          %p513 = pneg %p379
        $region66: #{tpu_custom_call.1} parent=11 // pred_check_branch
          %515 = sbr.rel (%p513) target = $region68
        $region67: #{tpu_custom_call.1} parent=11 // pred_region
          _
        $region68: #{tpu_custom_call.1} parent=11 // pred_fallthru
          _
        // Predicated region
        $region69: #{tpu_custom_call.1} parent=11 // pred_check
          %p516 = pneg %p400
        $region70: #{tpu_custom_call.1} parent=11 // pred_check_branch
          %518 = sbr.rel (%p516) target = $region72
        $region71: #{tpu_custom_call.1} parent=11 // pred_region
          _
        $region72: #{tpu_custom_call.1} parent=11 // pred_fallthru
          _
      $region12: #{tpu_custom_call.1} parent=5 // pred_fallthru
        _
      %p519 = scmp.lt.s32.totalorder %s33, 2
      // Predicated region
      $region73: #{tpu_custom_call.1} parent=5 // pred_check
        %p520 = pneg %p519
      $region74: #{tpu_custom_call.1} parent=5 // pred_check_branch
        %522 = sbr.rel (%p520) target = $region76
      $region75: #{tpu_custom_call.1} parent=5 // pred_region
        // Predicated region
        $region77: #{tpu_custom_call.1} parent=75 // pred_check
          %p523 = pneg %p53
        $region78: #{tpu_custom_call.1} parent=75 // pred_check_branch
          %525 = sbr.rel (%p523) target = $region80
        $region79: #{tpu_custom_call.1} parent=75 // pred_region
          %s526 = sand.u32 %s43, 1
          %s527 = scalar_lea.sflag [#allocation3], %s526
          %s528 = sand.u32 %s43, 1
          %s529 = smul.addr %s528, 16
          %s530 = scalar_lea.vmem [#allocation2], %s529
          %532 = vsyncadd %s527, 0
          %s533 = smul.addr %s33, 2
          %s534 = smul.addr %s533, 8
          %s535 = scalar_lea.hbm %s0, %s534
          %s536 = sshll.u32 %s535, 4
          %s537 = int_to_ptr.hbm [resolvable:$true] %s536
          %s538 = sshll.u32 %s530, 4
          %s539 = int_to_ptr.vmem [resolvable:$true] %s538
          %544 = dma.hbm_to_vmem [thread:$0]  %s537, 256, %s539, %s527, 128, 128, 8
        $region80: #{tpu_custom_call.1} parent=75 // pred_fallthru
          _
        // Predicated region
        $region81: #{tpu_custom_call.1} parent=75 // pred_check
          %p545 = pneg %p79
        $region82: #{tpu_custom_call.1} parent=75 // pred_check_branch
          %547 = sbr.rel (%p545) target = $region84
        $region83: #{tpu_custom_call.1} parent=75 // pred_region
          %s548 = sand.u32 %s33, 1
          %s549 = scalar_lea.sflag [#allocation6], %s548
          %s550 = sand.u32 %s69, 1
          %s551 = scalar_lea.vmem [#allocation5], %s550
          %553 = vsyncadd %s549, 0
          %s554 = scalar_lea.hbm %s1, %s33
          %s556 = sshll.u32 %s554, 4
          %s557 = int_to_ptr.hbm [resolvable:$true] %s556
          %s558 = sshll.u32 %s551, 4
          %s559 = int_to_ptr.vmem [resolvable:$true] %s558
          %561 = dma.hbm_to_vmem [thread:$0]  %s557, 16, %s559, %s549
        $region84: #{tpu_custom_call.1} parent=75 // pred_fallthru
          _
      $region76: #{tpu_custom_call.1} parent=5 // pred_fallthru
        _
      %p562 = scmp.le.s32.totalorder 1, %s33
      %p563 = scmp.lt.s32.totalorder %s33, 3
      %p564 = pnand %p562, %p563
      %p565 = pneg %p564
      // Predicated region
      $region85: #{tpu_custom_call.1} parent=5 // pred_check
        _
      $region86: #{tpu_custom_call.1} parent=5 // pred_check_branch
        %567 = sbr.rel (%p564) target = $region88
      $region87: #{tpu_custom_call.1} parent=5 // pred_region
        %s568 = ssub.s32 %s33, 1
        %s569 = sand.u32 %s46, 1
        %s570 = scalar_lea.sflag [#allocation3], %s569
        %s571 = sand.u32 %s46, 1
        %s572 = smul.addr %s571, 16
        %s573 = scalar_lea.vmem [#allocation2], %s572
        // Predicated region
        $region89: #{tpu_custom_call.1} parent=87 // pred_check
          %p574 = pneg %p59
        $region90: #{tpu_custom_call.1} parent=87 // pred_check_branch
          %576 = sbr.rel (%p574) target = $region92
        $region91: #{tpu_custom_call.1} parent=87 // pred_region
          %578 = dma.done %s570, 256
        $region92: #{tpu_custom_call.1} parent=87 // pred_fallthru
          _
        %s579 = sand.u32 %s38, 1
        %s580 = scalar_lea.sflag [#allocation6], %s579
        %s581 = sand.u32 %s72, 1
        %s582 = scalar_lea.vmem [#allocation5], %s581
        // Predicated region
        $region93: #{tpu_custom_call.1} parent=87 // pred_check
          %p583 = pneg %p85
        $region94: #{tpu_custom_call.1} parent=87 // pred_check_branch
          %585 = sbr.rel (%p583) target = $region96
        $region95: #{tpu_custom_call.1} parent=87 // pred_region
          %587 = dma.done %s580, 16
        $region96: #{tpu_custom_call.1} parent=87 // pred_fallthru
          _
        // Predicated region
        $region97: #{tpu_custom_call.1} parent=87 // pred_check
          %p588 = pneg %p169
        $region98: #{tpu_custom_call.1} parent=87 // pred_check_branch
          %590 = sbr.rel (%p588) target = $region100
        $region99: #{tpu_custom_call.1} parent=87 // pred_region
          %592 = dma.done [#allocation6], 2048
        $region100: #{tpu_custom_call.1} parent=87 // pred_fallthru
          _
        // Predicated region
        $region101: #{tpu_custom_call.1} parent=87 // pred_check
          %p593 = pneg %p211
        $region102: #{tpu_custom_call.1} parent=87 // pred_check_branch
          %595 = sbr.rel (%p593) target = $region104
        $region103: #{tpu_custom_call.1} parent=87 // pred_region
          %597 = dma.done [#allocation9], 2048
        $region104: #{tpu_custom_call.1} parent=87 // pred_fallthru
          _
        // Predicated region
        $region105: #{tpu_custom_call.1} parent=87 // pred_check
          %p598 = pneg %p253
        $region106: #{tpu_custom_call.1} parent=87 // pred_check_branch
          %600 = sbr.rel (%p598) target = $region108
        $region107: #{tpu_custom_call.1} parent=87 // pred_region
          %602 = dma.done [#allocation9], 2048
        $region108: #{tpu_custom_call.1} parent=87 // pred_fallthru
          _
        %s603 = sand.u32 %s46, 1
        %s604 = scalar_lea.sflag [#allocation3], %s603
        %s605 = sand.u32 %s46, 1
        %s606 = smul.addr %s605, 16
        %s607 = scalar_lea.vmem [#allocation2], %s606
        %p608 = pneg %p59
        %p609 = pneg %p56
        %s610 = sand.u32 %s38, 1
        %s611 = scalar_lea.sflag [#allocation6], %s610
        %s612 = sand.u32 %s72, 1
        %s613 = scalar_lea.vmem [#allocation5], %s612
        %p614 = pneg %p85
        %p615 = pneg %p82
        %p616 = pneg %p106
        %p617 = pneg %p103
        %p618 = pneg %p127
        %p619 = pneg %p124
        %p620 = pneg %p148
        %p621 = pneg %p145
        %p622 = pneg %p169
        %p623 = pneg %p166
        %p624 = pneg %p190
        %p625 = pneg %p187
        %p626 = pneg %p211
        %p627 = pneg %p208
        %p628 = pneg %p232
        %p629 = pneg %p229
        %p630 = pneg %p253
        %p631 = pneg %p250
        %p632 = pneg %p274
        %p633 = pneg %p271
        %p634 = pneg %p295
        %p635 = pneg %p292
        %p636 = pneg %p316
        %p637 = pneg %p313
        %p638 = pneg %p337
        %p639 = pneg %p334
        %p640 = pneg %p358
        %p641 = pneg %p355
        %p642 = pneg %p379
        %p643 = pneg %p376
        %p644 = pneg %p400
        %p645 = pneg %p397
        %p646 = pneg %p426
        %p647 = pneg %p423
        %s648 = sand.u32 %s413, 1
        %s649 = scalar_lea.sflag [#allocation4], %s648
        %s650 = sand.u32 %s413, 1
        %s651 = smul.addr %s650, 16
        %s652 = scalar_lea.vmem [#allocation11], %s651
        %v653 = vld [vmem:[%s573] sm:$0xff]
        %v654 = vld [vmem:[%s573 + $0x8] sm:$0xff]
        %v655 = vld [vmem:[%s2] sm:$0xff]
        %v656 = vld [vmem:[%s2 + $0x8] sm:$0xff]
        %v657 = vld [vmem:[%s2 + $0x10] sm:$0xff]
        %v658 = vld [vmem:[%s2 + $0x18] sm:$0xff]
        %v659 = vld [vmem:[%s2 + $0x20] sm:$0xff]
        %v660 = vld [vmem:[%s2 + $0x28] sm:$0xff]
        %v661 = vld [vmem:[%s2 + $0x30] sm:$0xff]
        %v662 = vld [vmem:[%s2 + $0x38] sm:$0xff]
        %v663 = vld [vmem:[%s2 + $0x40] sm:$0xff]
        %v664 = vld [vmem:[%s2 + $0x48] sm:$0xff]
        %v665 = vld [vmem:[%s2 + $0x50] sm:$0xff]
        %v666 = vld [vmem:[%s2 + $0x58] sm:$0xff]
        %v667 = vld [vmem:[%s2 + $0x60] sm:$0xff]
        %v668 = vld [vmem:[%s2 + $0x68] sm:$0xff]
        %v669 = vld [vmem:[%s2 + $0x70] sm:$0xff]
        %v670 = vld [vmem:[%s2 + $0x78] sm:$0xff]
        %v671 = vld [vmem:[%s582] sm:$0x1]
        %v673 = vperm.slane %v671, 0
        %675 = vmatpush.msra.mxu0 %v670
        %676 = vmatpush.msra.mxu0 %v669
        %677 = vmatpush.msra.mxu0 %v668
        %678 = vmatpush.msra.mxu0 %v667
        %679 = vmatpush.msra.mxu0 %v666
        %680 = vmatpush.msra.mxu0 %v665
        %681 = vmatpush.msra.mxu0 %v664
        %682 = vmatpush.msra.mxu0 %v663
        %683 = vmatpush.msra.mxu0 %v662
        %684 = vmatpush.msra.mxu0 %v661
        %685 = vmatpush.msra.mxu0 %v660
        %686 = vmatpush.msra.mxu0 %v659
        %687 = vmatpush.msra.mxu0 %v658
        %688 = vmatpush.msra.mxu0 %v657
        %689 = vmatpush.msra.mxu0 %v656
        %690 = vmatpush.msra.mxu0 %v655
        %691 = vmatmul.f32.gmra.mxu0 %v653
        %v692 = vpop.f32.mrf.mxu0
        %v693 = vadd.f32 %v673, %v692
        %694 = vmatmul.f32.gmra.mxu0 %v654
        %v695 = vpop.f32.mrf.mxu0
        %v696 = vadd.f32 %v673, %v695
        %697 = vdwg.mxu0
        %698 = vadd.xlane.f32.xlu0 %v693
        %v699 = vpop.xlane.xlu0 %698
        %700 = vadd.xlane.f32.xlu0 %v696
        %v701 = vpop.xlane.xlu0 %700
        %v702 = vrcp.pop 128.0
        %v703 = vmul.f32 128.0, %v702
        %v704 = vsub.f32 1.0, %v703
        %v705 = vmul.f32 %v702, %v704
        %v706 = vadd.f32 %v702, %v705
        %vm707 = vweird.f32 %v702
        %v708 = vsel %vm707, %v702, %v706
        %v709 = vmul.f32 %v699, %v708
        %v710 = vmul.f32 %v701, %v708
        %v711 = vsub.f32 %v693, %v709
        %v712 = vsub.f32 %v696, %v710
        %v713 = vmul.f32 %v711, %v711
        %v714 = vmul.f32 %v712, %v712
        %715 = vadd.xlane.f32.xlu0 %v713
        %v716 = vpop.xlane.xlu0 %715
        %717 = vadd.xlane.f32.xlu0 %v714
        %v718 = vpop.xlane.xlu0 %717
        %v719 = vmul.f32 %v716, %v708
        %v720 = vmul.f32 %v718, %v708
        %v721 = vadd.f32 %v719, 1e-05
        %v722 = vadd.f32 %v720, 1e-05
        %v723 = vrsqrt.pop %v721
        %v724 = vmul.f32 %v723, %v721
        %v725 = vmul.f32 %v724, %v723
        %v726 = vmul.f32 0.5, %v725
        %v727 = vsub.f32 1.5, %v726
        %v728 = vmul.f32 %v723, %v727
        %vm729 = vweird.f32 %v721
        %vm730 = vweird.f32 %v723
        %vm731 = vmor %vm729, %vm730
        %v732 = vsel %vm731, %v723, %v728
        %v733 = vrsqrt.pop %v722
        %v734 = vmul.f32 %v733, %v722
        %v735 = vmul.f32 %v734, %v733
        %v736 = vmul.f32 0.5, %v735
        %v737 = vsub.f32 1.5, %v736
        %v738 = vmul.f32 %v733, %v737
        %vm739 = vweird.f32 %v722
        %vm740 = vweird.f32 %v733
        %vm741 = vmor %vm739, %vm740
        %v742 = vsel %vm741, %v733, %v738
        %v743 = vmul.f32 %v711, %v732
        %v744 = vmul.f32 %v712, %v742
        %v745 = vld [vmem:[%s3] sm:$0x1]
        %v747 = vperm.slane %v745, 0
        %v749 = vmul.f32 %v743, %v747
        %v750 = vmul.f32 %v744, %v747
        %v751 = vld [vmem:[%s4] sm:$0x1]
        %v753 = vperm.slane %v751, 0
        %v755 = vadd.f32 %v749, %v753
        %v756 = vadd.f32 %v750, %v753
        %v757 = vld [vmem:[#allocation7] sm:$0xff]
        %v758 = vld [vmem:[#allocation7 + $0x8] sm:$0xff]
        %v759 = vld [vmem:[#allocation7 + $0x10] sm:$0xff]
        %v760 = vld [vmem:[#allocation7 + $0x18] sm:$0xff]
        %v761 = vld [vmem:[#allocation7 + $0x20] sm:$0xff]
        %v762 = vld [vmem:[#allocation7 + $0x28] sm:$0xff]
        %v763 = vld [vmem:[#allocation7 + $0x30] sm:$0xff]
        %v764 = vld [vmem:[#allocation7 + $0x38] sm:$0xff]
        %v765 = vld [vmem:[#allocation7 + $0x40] sm:$0xff]
        %v766 = vld [vmem:[#allocation7 + $0x48] sm:$0xff]
        %v767 = vld [vmem:[#allocation7 + $0x50] sm:$0xff]
        %v768 = vld [vmem:[#allocation7 + $0x58] sm:$0xff]
        %v769 = vld [vmem:[#allocation7 + $0x60] sm:$0xff]
        %v770 = vld [vmem:[#allocation7 + $0x68] sm:$0xff]
        %v771 = vld [vmem:[#allocation7 + $0x70] sm:$0xff]
        %v772 = vld [vmem:[#allocation7 + $0x78] sm:$0xff]
        %v773 = vld [vmem:[%s6] sm:$0x1]
        %v775 = vperm.slane %v773, 0
        %777 = vmatpush.msra.mxu0 %v772
        %778 = vmatpush.msra.mxu0 %v771
        %779 = vmatpush.msra.mxu0 %v770
        %780 = vmatpush.msra.mxu0 %v769
        %781 = vmatpush.msra.mxu0 %v768
        %782 = vmatpush.msra.mxu0 %v767
        %783 = vmatpush.msra.mxu0 %v766
        %784 = vmatpush.msra.mxu0 %v765
        %785 = vmatpush.msra.mxu0 %v764
        %786 = vmatpush.msra.mxu0 %v763
        %787 = vmatpush.msra.mxu0 %v762
        %788 = vmatpush.msra.mxu0 %v761
        %789 = vmatpush.msra.mxu0 %v760
        %790 = vmatpush.msra.mxu0 %v759
        %791 = vmatpush.msra.mxu0 %v758
        %792 = vmatpush.msra.mxu0 %v757
        %793 = vmatmul.f32.gmra.mxu0 %v755
        %v794 = vpop.f32.mrf.mxu0
        %v795 = vadd.f32 %v775, %v794
        %796 = vmatmul.f32.gmra.mxu0 %v756
        %v797 = vpop.f32.mrf.mxu0
        %v798 = vadd.f32 %v775, %v797
        %799 = vdwg.mxu0
        %v800 = vld [vmem:[#allocation8] sm:$0xff]
        %v801 = vld [vmem:[#allocation8 + $0x8] sm:$0xff]
        %v802 = vld [vmem:[#allocation8 + $0x10] sm:$0xff]
        %v803 = vld [vmem:[#allocation8 + $0x18] sm:$0xff]
        %v804 = vld [vmem:[#allocation8 + $0x20] sm:$0xff]
        %v805 = vld [vmem:[#allocation8 + $0x28] sm:$0xff]
        %v806 = vld [vmem:[#allocation8 + $0x30] sm:$0xff]
        %v807 = vld [vmem:[#allocation8 + $0x38] sm:$0xff]
        %v808 = vld [vmem:[#allocation8 + $0x40] sm:$0xff]
        %v809 = vld [vmem:[#allocation8 + $0x48] sm:$0xff]
        %v810 = vld [vmem:[#allocation8 + $0x50] sm:$0xff]
        %v811 = vld [vmem:[#allocation8 + $0x58] sm:$0xff]
        %v812 = vld [vmem:[#allocation8 + $0x60] sm:$0xff]
        %v813 = vld [vmem:[#allocation8 + $0x68] sm:$0xff]
        %v814 = vld [vmem:[#allocation8 + $0x70] sm:$0xff]
        %v815 = vld [vmem:[#allocation8 + $0x78] sm:$0xff]
        %v816 = vld [vmem:[%s8] sm:$0x1]
        %v818 = vperm.slane %v816, 0
        %820 = vmatpush.msra.mxu0 %v815
        %821 = vmatpush.msra.mxu0 %v814
        %822 = vmatpush.msra.mxu0 %v813
        %823 = vmatpush.msra.mxu0 %v812
        %824 = vmatpush.msra.mxu0 %v811
        %825 = vmatpush.msra.mxu0 %v810
        %826 = vmatpush.msra.mxu0 %v809
        %827 = vmatpush.msra.mxu0 %v808
        %828 = vmatpush.msra.mxu0 %v807
        %829 = vmatpush.msra.mxu0 %v806
        %830 = vmatpush.msra.mxu0 %v805
        %831 = vmatpush.msra.mxu0 %v804
        %832 = vmatpush.msra.mxu0 %v803
        %833 = vmatpush.msra.mxu0 %v802
        %834 = vmatpush.msra.mxu0 %v801
        %835 = vmatpush.msra.mxu0 %v800
        %836 = vmatmul.f32.gmra.mxu0 %v755
        %v837 = vpop.f32.mrf.mxu0
        %v838 = vadd.f32 %v818, %v837
        %839 = vmatmul.f32.gmra.mxu0 %v756
        %v840 = vpop.f32.mrf.mxu0
        %v841 = vadd.f32 %v818, %v840
        %842 = vdwg.mxu0
        %v843 = vld [vmem:[#allocation10] sm:$0xff]
        %v844 = vld [vmem:[#allocation10 + $0x8] sm:$0xff]
        %v845 = vld [vmem:[#allocation10 + $0x10] sm:$0xff]
        %v846 = vld [vmem:[#allocation10 + $0x18] sm:$0xff]
        %v847 = vld [vmem:[#allocation10 + $0x20] sm:$0xff]
        %v848 = vld [vmem:[#allocation10 + $0x28] sm:$0xff]
        %v849 = vld [vmem:[#allocation10 + $0x30] sm:$0xff]
        %v850 = vld [vmem:[#allocation10 + $0x38] sm:$0xff]
        %v851 = vld [vmem:[#allocation10 + $0x40] sm:$0xff]
        %v852 = vld [vmem:[#allocation10 + $0x48] sm:$0xff]
        %v853 = vld [vmem:[#allocation10 + $0x50] sm:$0xff]
        %v854 = vld [vmem:[#allocation10 + $0x58] sm:$0xff]
        %v855 = vld [vmem:[#allocation10 + $0x60] sm:$0xff]
        %v856 = vld [vmem:[#allocation10 + $0x68] sm:$0xff]
        %v857 = vld [vmem:[#allocation10 + $0x70] sm:$0xff]
        %v858 = vld [vmem:[#allocation10 + $0x78] sm:$0xff]
        %v859 = vld [vmem:[%s10] sm:$0x1]
        %v861 = vperm.slane %v859, 0
        %863 = vmatpush.msra.mxu0 %v858
        %864 = vmatpush.msra.mxu0 %v857
        %865 = vmatpush.msra.mxu0 %v856
        %866 = vmatpush.msra.mxu0 %v855
        %867 = vmatpush.msra.mxu0 %v854
        %868 = vmatpush.msra.mxu0 %v853
        %869 = vmatpush.msra.mxu0 %v852
        %870 = vmatpush.msra.mxu0 %v851
        %871 = vmatpush.msra.mxu0 %v850
        %872 = vmatpush.msra.mxu0 %v849
        %873 = vmatpush.msra.mxu0 %v848
        %874 = vmatpush.msra.mxu0 %v847
        %875 = vmatpush.msra.mxu0 %v846
        %876 = vmatpush.msra.mxu0 %v845
        %877 = vmatpush.msra.mxu0 %v844
        %878 = vmatpush.msra.mxu0 %v843
        %879 = vmatmul.f32.gmra.mxu0 %v755
        %v880 = vpop.f32.mrf.mxu0
        %v881 = vadd.f32 %v861, %v880
        %882 = vmatmul.f32.gmra.mxu0 %v756
        %v883 = vpop.f32.mrf.mxu0
        %v884 = vadd.f32 %v861, %v883
        %885 = vdwg.mxu0
        %vm886 = vcmask 130048
        %v888 = vsel %vm886, %v795, 0
        %v891 = vsel %vm886, %v798, 0
        %v894 = vsel %vm886, %v838, 0
        %v897 = vsel %vm886, %v841, 0
        %899 = vmatpush.xpose.msra.mxu0 0.0
        %900 = vmatpush.xpose.msra.mxu0 0.0
        %901 = vmatpush.xpose.msra.mxu0 0.0
        %902 = vmatpush.xpose.msra.mxu0 0.0
        %903 = vmatpush.xpose.msra.mxu0 0.0
        %904 = vmatpush.xpose.msra.mxu0 0.0
        %905 = vmatpush.xpose.msra.mxu0 0.0
        %906 = vmatpush.xpose.msra.mxu0 0.0
        %907 = vmatpush.xpose.msra.mxu0 0.0
        %908 = vmatpush.xpose.msra.mxu0 0.0
        %909 = vmatpush.xpose.msra.mxu0 0.0
        %910 = vmatpush.xpose.msra.mxu0 0.0
        %911 = vmatpush.xpose.msra.mxu0 0.0
        %912 = vmatpush.xpose.msra.mxu0 0.0
        %913 = vmatpush.xpose.msra.mxu0 %v897
        %914 = vmatpush.xpose.msra.mxu0 %v894
        %915 = vmatmul.f32.gmra.mxu0 %v888
        %v916 = vpop.f32.mrf.mxu0
        %v917 = vadd.f32 0.0, %v916
        %918 = vmatmul.f32.gmra.mxu0 %v891
        %v919 = vpop.f32.mrf.mxu0
        %v920 = vadd.f32 0.0, %v919
        %921 = vdwg.mxu0
        %v922 = vmul.f32 %v917, 0.25
        %v923 = vmul.f32 %v920, 0.25
        %v924 = vsel %vm886, %v922, -inf
        %925 = vmax.xlane.f32.xlu0 %v924
        %v926 = vpop.xlane.xlu0 %925
        %v927 = vsel %vm886, %v923, -inf
        %928 = vmax.xlane.f32.xlu0 %v927
        %v929 = vpop.xlane.xlu0 %928
        %v930 = vsub.f32 %v922, %v926
        %v931 = vsub.f32 %v923, %v929
        %v932 = vmul.f32 %v930, 1.442695
        %v933 = vpow.pop %v932
        %v934 = vmul.f32 %v931, 1.442695
        %v935 = vpow.pop %v934
        %v936 = vsel %vm886, %v933, 0.0
        %937 = vadd.xlane.f32.xlu0 %v936
        %v938 = vpop.xlane.xlu0 %937
        %v939 = vsel %vm886, %v935, 0.0
        %940 = vadd.xlane.f32.xlu0 %v939
        %v941 = vpop.xlane.xlu0 %940
        %v942 = vrcp.pop %v938
        %v943 = vmul.f32 %v938, %v942
        %v944 = vsub.f32 1.0, %v943
        %v945 = vmul.f32 %v942, %v944
        %v946 = vadd.f32 %v942, %v945
        %vm947 = vweird.f32 %v938
        %vm948 = vweird.f32 %v942
        %vm949 = vmor %vm947, %vm948
        %v950 = vsel %vm949, %v942, %v946
        %v951 = vand.u32 2147483647, %v938
        %vm952 = vcmp.eq.f32.partialorder %v951, 8.507059e+37
        %v953 = vand.u32 %v938, 2147483648
        %v954 = vor.u32 1.1754944e-38, %v953
        %v955 = vsel %vm952, %v954, %v950
        %v956 = vmul.f32 %v933, %v955
        %v957 = vrcp.pop %v941
        %v958 = vmul.f32 %v941, %v957
        %v959 = vsub.f32 1.0, %v958
        %v960 = vmul.f32 %v957, %v959
        %v961 = vadd.f32 %v957, %v960
        %vm962 = vweird.f32 %v941
        %vm963 = vweird.f32 %v957
        %vm964 = vmor %vm962, %vm963
        %v965 = vsel %vm964, %v957, %v961
        %v966 = vand.u32 2147483647, %v941
        %vm967 = vcmp.eq.f32.partialorder %v966, 8.507059e+37
        %v968 = vand.u32 %v941, 2147483648
        %v969 = vor.u32 1.1754944e-38, %v968
        %v970 = vsel %vm967, %v969, %v965
        %v971 = vmul.f32 %v935, %v970
        %v973 = vsel %vm886, %v956, 0
        %v976 = vsel %vm886, %v971, 0
        %978 = vmatpush.msra.mxu0 0.0
        %979 = vmatpush.msra.mxu0 0.0
        %980 = vmatpush.msra.mxu0 0.0
        %981 = vmatpush.msra.mxu0 0.0
        %982 = vmatpush.msra.mxu0 0.0
        %983 = vmatpush.msra.mxu0 0.0
        %984 = vmatpush.msra.mxu0 0.0
        %985 = vmatpush.msra.mxu0 0.0
        %986 = vmatpush.msra.mxu0 0.0
        %987 = vmatpush.msra.mxu0 0.0
        %988 = vmatpush.msra.mxu0 0.0
        %989 = vmatpush.msra.mxu0 0.0
        %990 = vmatpush.msra.mxu0 0.0
        %991 = vmatpush.msra.mxu0 0.0
        %992 = vmatpush.msra.mxu0 %v884
        %993 = vmatpush.msra.mxu0 %v881
        %994 = vmatmul.f32.gmra.mxu0 %v973
        %v995 = vpop.f32.mrf.mxu0
        %v996 = vadd.f32 0.0, %v995
        %997 = vmatmul.f32.gmra.mxu0 %v976
        %v998 = vpop.f32.mrf.mxu0
        %v999 = vadd.f32 0.0, %v998
        %1000 = vdwg.mxu0
        %1001 = vrot.lane.b32.xlu0 %v795, 112
        %v1002 = vpop.permute.xlu0 %1001
        %1003 = vrot.lane.b32.xlu0 %v798, 112
        %v1004 = vpop.permute.xlu0 %1003
        %1005 = vrot.lane.b32.xlu0 %v838, 112
        %v1006 = vpop.permute.xlu0 %1005
        %1007 = vrot.lane.b32.xlu0 %v841, 112
        %v1008 = vpop.permute.xlu0 %1007
        %v1009 = vsel %vm886, %v1002, 0
        %v1011 = vsel %vm886, %v1004, 0
        %v1013 = vsel %vm886, %v1006, 0
        %v1015 = vsel %vm886, %v1008, 0
        %1017 = vmatpush.xpose.msra.mxu0 0.0
        %1018 = vmatpush.xpose.msra.mxu0 0.0
        %1019 = vmatpush.xpose.msra.mxu0 0.0
        %1020 = vmatpush.xpose.msra.mxu0 0.0
        %1021 = vmatpush.xpose.msra.mxu0 0.0
        %1022 = vmatpush.xpose.msra.mxu0 0.0
        %1023 = vmatpush.xpose.msra.mxu0 0.0
        %1024 = vmatpush.xpose.msra.mxu0 0.0
        %1025 = vmatpush.xpose.msra.mxu0 0.0
        %1026 = vmatpush.xpose.msra.mxu0 0.0
        %1027 = vmatpush.xpose.msra.mxu0 0.0
        %1028 = vmatpush.xpose.msra.mxu0 0.0
        %1029 = vmatpush.xpose.msra.mxu0 0.0
        %1030 = vmatpush.xpose.msra.mxu0 0.0
        %1031 = vmatpush.xpose.msra.mxu0 %v1015
        %1032 = vmatpush.xpose.msra.mxu0 %v1013
        %1033 = vmatmul.f32.gmra.mxu0 %v1009
        %v1034 = vpop.f32.mrf.mxu0
        %v1035 = vadd.f32 0.0, %v1034
        %1036 = vmatmul.f32.gmra.mxu0 %v1011
        %v1037 = vpop.f32.mrf.mxu0
        %v1038 = vadd.f32 0.0, %v1037
        %1039 = vdwg.mxu0
        %v1040 = vmul.f32 %v1035, 0.25
        %v1041 = vmul.f32 %v1038, 0.25
        %v1042 = vsel %vm886, %v1040, -inf
        %1043 = vmax.xlane.f32.xlu0 %v1042
        %v1044 = vpop.xlane.xlu0 %1043
        %v1045 = vsel %vm886, %v1041, -inf
        %1046 = vmax.xlane.f32.xlu0 %v1045
        %v1047 = vpop.xlane.xlu0 %1046
        %v1048 = vsub.f32 %v1040, %v1044
        %v1049 = vsub.f32 %v1041, %v1047
        %v1050 = vmul.f32 %v1048, 1.442695
        %v1051 = vpow.pop %v1050
        %v1052 = vmul.f32 %v1049, 1.442695
        %v1053 = vpow.pop %v1052
        %v1054 = vsel %vm886, %v1051, 0.0
        %1055 = vadd.xlane.f32.xlu0 %v1054
        %v1056 = vpop.xlane.xlu0 %1055
        %v1057 = vsel %vm886, %v1053, 0.0
        %1058 = vadd.xlane.f32.xlu0 %v1057
        %v1059 = vpop.xlane.xlu0 %1058
        %v1060 = vrcp.pop %v1056
        %v1061 = vmul.f32 %v1056, %v1060
        %v1062 = vsub.f32 1.0, %v1061
        %v1063 = vmul.f32 %v1060, %v1062
        %v1064 = vadd.f32 %v1060, %v1063
        %vm1065 = vweird.f32 %v1056
        %vm1066 = vweird.f32 %v1060
        %vm1067 = vmor %vm1065, %vm1066
        %v1068 = vsel %vm1067, %v1060, %v1064
        %v1069 = vand.u32 2147483647, %v1056
        %vm1070 = vcmp.eq.f32.partialorder %v1069, 8.507059e+37
        %v1071 = vand.u32 %v1056, 2147483648
        %v1072 = vor.u32 1.1754944e-38, %v1071
        %v1073 = vsel %vm1070, %v1072, %v1068
        %v1074 = vmul.f32 %v1051, %v1073
        %v1075 = vrcp.pop %v1059
        %v1076 = vmul.f32 %v1059, %v1075
        %v1077 = vsub.f32 1.0, %v1076
        %v1078 = vmul.f32 %v1075, %v1077
        %v1079 = vadd.f32 %v1075, %v1078
        %vm1080 = vweird.f32 %v1059
        %vm1081 = vweird.f32 %v1075
        %vm1082 = vmor %vm1080, %vm1081
        %v1083 = vsel %vm1082, %v1075, %v1079
        %v1084 = vand.u32 2147483647, %v1059
        %vm1085 = vcmp.eq.f32.partialorder %v1084, 8.507059e+37
        %v1086 = vand.u32 %v1059, 2147483648
        %v1087 = vor.u32 1.1754944e-38, %v1086
        %v1088 = vsel %vm1085, %v1087, %v1083
        %v1089 = vmul.f32 %v1053, %v1088
        %1092 = vrot.lane.b32.xlu0 %v881, 112
        %v1093 = vpop.permute.xlu0 %1092
        %1094 = vrot.lane.b32.xlu0 %v884, 112
        %v1095 = vpop.permute.xlu0 %1094
        %v1099 = vsel %vm886, %v1074, 0
        %v1102 = vsel %vm886, %v1089, 0
        %1104 = vmatpush.msra.mxu0 0.0
        %1105 = vmatpush.msra.mxu0 0.0
        %1106 = vmatpush.msra.mxu0 0.0
        %1107 = vmatpush.msra.mxu0 0.0
        %1108 = vmatpush.msra.mxu0 0.0
        %1109 = vmatpush.msra.mxu0 0.0
        %1110 = vmatpush.msra.mxu0 0.0
        %1111 = vmatpush.msra.mxu0 0.0
        %1112 = vmatpush.msra.mxu0 0.0
        %1113 = vmatpush.msra.mxu0 0.0
        %1114 = vmatpush.msra.mxu0 0.0
        %1115 = vmatpush.msra.mxu0 0.0
        %1116 = vmatpush.msra.mxu0 0.0
        %1117 = vmatpush.msra.mxu0 0.0
        %1118 = vmatpush.msra.mxu0 %v1095
        %1119 = vmatpush.msra.mxu0 %v1093
        %1120 = vmatmul.f32.gmra.mxu0 %v1099
        %v1121 = vpop.f32.mrf.mxu0
        %v1122 = vadd.f32 0.0, %v1121
        %1123 = vmatmul.f32.gmra.mxu0 %v1102
        %v1124 = vpop.f32.mrf.mxu0
        %v1125 = vadd.f32 0.0, %v1124
        %1126 = vdwg.mxu0
        %1127 = vrot.lane.b32.xlu0 %v795, 96
        %v1128 = vpop.permute.xlu0 %1127
        %1129 = vrot.lane.b32.xlu0 %v798, 96
        %v1130 = vpop.permute.xlu0 %1129
        %1131 = vrot.lane.b32.xlu0 %v838, 96
        %v1132 = vpop.permute.xlu0 %1131
        %1133 = vrot.lane.b32.xlu0 %v841, 96
        %v1134 = vpop.permute.xlu0 %1133
        %v1135 = vsel %vm886, %v1128, 0
        %v1137 = vsel %vm886, %v1130, 0
        %v1139 = vsel %vm886, %v1132, 0
        %v1141 = vsel %vm886, %v1134, 0
        %1143 = vmatpush.xpose.msra.mxu0 0.0
        %1144 = vmatpush.xpose.msra.mxu0 0.0
        %1145 = vmatpush.xpose.msra.mxu0 0.0
        %1146 = vmatpush.xpose.msra.mxu0 0.0
        %1147 = vmatpush.xpose.msra.mxu0 0.0
        %1148 = vmatpush.xpose.msra.mxu0 0.0
        %1149 = vmatpush.xpose.msra.mxu0 0.0
        %1150 = vmatpush.xpose.msra.mxu0 0.0
        %1151 = vmatpush.xpose.msra.mxu0 0.0
        %1152 = vmatpush.xpose.msra.mxu0 0.0
        %1153 = vmatpush.xpose.msra.mxu0 0.0
        %1154 = vmatpush.xpose.msra.mxu0 0.0
        %1155 = vmatpush.xpose.msra.mxu0 0.0
        %1156 = vmatpush.xpose.msra.mxu0 0.0
        %1157 = vmatpush.xpose.msra.mxu0 %v1141
        %1158 = vmatpush.xpose.msra.mxu0 %v1139
        %1159 = vmatmul.f32.gmra.mxu0 %v1135
        %v1160 = vpop.f32.mrf.mxu0
        %v1161 = vadd.f32 0.0, %v1160
        %1162 = vmatmul.f32.gmra.mxu0 %v1137
        %v1163 = vpop.f32.mrf.mxu0
        %v1164 = vadd.f32 0.0, %v1163
        %1165 = vdwg.mxu0
        %v1166 = vmul.f32 %v1161, 0.25
        %v1167 = vmul.f32 %v1164, 0.25
        %v1168 = vsel %vm886, %v1166, -inf
        %1169 = vmax.xlane.f32.xlu0 %v1168
        %v1170 = vpop.xlane.xlu0 %1169
        %v1171 = vsel %vm886, %v1167, -inf
        %1172 = vmax.xlane.f32.xlu0 %v1171
        %v1173 = vpop.xlane.xlu0 %1172
        %v1174 = vsub.f32 %v1166, %v1170
        %v1175 = vsub.f32 %v1167, %v1173
        %v1176 = vmul.f32 %v1174, 1.442695
        %v1177 = vpow.pop %v1176
        %v1178 = vmul.f32 %v1175, 1.442695
        %v1179 = vpow.pop %v1178
        %v1180 = vsel %vm886, %v1177, 0.0
        %1181 = vadd.xlane.f32.xlu0 %v1180
        %v1182 = vpop.xlane.xlu0 %1181
        %v1183 = vsel %vm886, %v1179, 0.0
        %1184 = vadd.xlane.f32.xlu0 %v1183
        %v1185 = vpop.xlane.xlu0 %1184
        %v1186 = vrcp.pop %v1182
        %v1187 = vmul.f32 %v1182, %v1186
        %v1188 = vsub.f32 1.0, %v1187
        %v1189 = vmul.f32 %v1186, %v1188
        %v1190 = vadd.f32 %v1186, %v1189
        %vm1191 = vweird.f32 %v1182
        %vm1192 = vweird.f32 %v1186
        %vm1193 = vmor %vm1191, %vm1192
        %v1194 = vsel %vm1193, %v1186, %v1190
        %v1195 = vand.u32 2147483647, %v1182
        %vm1196 = vcmp.eq.f32.partialorder %v1195, 8.507059e+37
        %v1197 = vand.u32 %v1182, 2147483648
        %v1198 = vor.u32 1.1754944e-38, %v1197
        %v1199 = vsel %vm1196, %v1198, %v1194
        %v1200 = vmul.f32 %v1177, %v1199
        %v1201 = vrcp.pop %v1185
        %v1202 = vmul.f32 %v1185, %v1201
        %v1203 = vsub.f32 1.0, %v1202
        %v1204 = vmul.f32 %v1201, %v1203
        %v1205 = vadd.f32 %v1201, %v1204
        %vm1206 = vweird.f32 %v1185
        %vm1207 = vweird.f32 %v1201
        %vm1208 = vmor %vm1206, %vm1207
        %v1209 = vsel %vm1208, %v1201, %v1205
        %v1210 = vand.u32 2147483647, %v1185
        %vm1211 = vcmp.eq.f32.partialorder %v1210, 8.507059e+37
        %v1212 = vand.u32 %v1185, 2147483648
        %v1213 = vor.u32 1.1754944e-38, %v1212
        %v1214 = vsel %vm1211, %v1213, %v1209
        %v1215 = vmul.f32 %v1179, %v1214
        %1216 = vrot.lane.b32.xlu0 %v881, 96
        %v1217 = vpop.permute.xlu0 %1216
        %1218 = vrot.lane.b32.xlu0 %v884, 96
        %v1219 = vpop.permute.xlu0 %1218
        %v1223 = vsel %vm886, %v1200, 0
        %v1226 = vsel %vm886, %v1215, 0
        %1228 = vmatpush.msra.mxu0 0.0
        %1229 = vmatpush.msra.mxu0 0.0
        %1230 = vmatpush.msra.mxu0 0.0
        %1231 = vmatpush.msra.mxu0 0.0
        %1232 = vmatpush.msra.mxu0 0.0
        %1233 = vmatpush.msra.mxu0 0.0
        %1234 = vmatpush.msra.mxu0 0.0
        %1235 = vmatpush.msra.mxu0 0.0
        %1236 = vmatpush.msra.mxu0 0.0
        %1237 = vmatpush.msra.mxu0 0.0
        %1238 = vmatpush.msra.mxu0 0.0
        %1239 = vmatpush.msra.mxu0 0.0
        %1240 = vmatpush.msra.mxu0 0.0
        %1241 = vmatpush.msra.mxu0 0.0
        %1242 = vmatpush.msra.mxu0 %v1219
        %1243 = vmatpush.msra.mxu0 %v1217
        %1244 = vmatmul.f32.gmra.mxu0 %v1223
        %v1245 = vpop.f32.mrf.mxu0
        %v1246 = vadd.f32 0.0, %v1245
        %1247 = vmatmul.f32.gmra.mxu0 %v1226
        %v1248 = vpop.f32.mrf.mxu0
        %v1249 = vadd.f32 0.0, %v1248
        %1250 = vdwg.mxu0
        %1251 = vrot.lane.b32.xlu0 %v795, 80
        %v1252 = vpop.permute.xlu0 %1251
        %1253 = vrot.lane.b32.xlu0 %v798, 80
        %v1254 = vpop.permute.xlu0 %1253
        %1255 = vrot.lane.b32.xlu0 %v838, 80
        %v1256 = vpop.permute.xlu0 %1255
        %1257 = vrot.lane.b32.xlu0 %v841, 80
        %v1258 = vpop.permute.xlu0 %1257
        %v1259 = vsel %vm886, %v1252, 0
        %v1261 = vsel %vm886, %v1254, 0
        %v1263 = vsel %vm886, %v1256, 0
        %v1265 = vsel %vm886, %v1258, 0
        %1267 = vmatpush.xpose.msra.mxu0 0.0
        %1268 = vmatpush.xpose.msra.mxu0 0.0
        %1269 = vmatpush.xpose.msra.mxu0 0.0
        %1270 = vmatpush.xpose.msra.mxu0 0.0
        %1271 = vmatpush.xpose.msra.mxu0 0.0
        %1272 = vmatpush.xpose.msra.mxu0 0.0
        %1273 = vmatpush.xpose.msra.mxu0 0.0
        %1274 = vmatpush.xpose.msra.mxu0 0.0
        %1275 = vmatpush.xpose.msra.mxu0 0.0
        %1276 = vmatpush.xpose.msra.mxu0 0.0
        %1277 = vmatpush.xpose.msra.mxu0 0.0
        %1278 = vmatpush.xpose.msra.mxu0 0.0
        %1279 = vmatpush.xpose.msra.mxu0 0.0
        %1280 = vmatpush.xpose.msra.mxu0 0.0
        %1281 = vmatpush.xpose.msra.mxu0 %v1265
        %1282 = vmatpush.xpose.msra.mxu0 %v1263
        %1283 = vmatmul.f32.gmra.mxu0 %v1259
        %v1284 = vpop.f32.mrf.mxu0
        %v1285 = vadd.f32 0.0, %v1284
        %1286 = vmatmul.f32.gmra.mxu0 %v1261
        %v1287 = vpop.f32.mrf.mxu0
        %v1288 = vadd.f32 0.0, %v1287
        %1289 = vdwg.mxu0
        %v1290 = vmul.f32 %v1285, 0.25
        %v1291 = vmul.f32 %v1288, 0.25
        %v1292 = vsel %vm886, %v1290, -inf
        %1293 = vmax.xlane.f32.xlu0 %v1292
        %v1294 = vpop.xlane.xlu0 %1293
        %v1295 = vsel %vm886, %v1291, -inf
        %1296 = vmax.xlane.f32.xlu0 %v1295
        %v1297 = vpop.xlane.xlu0 %1296
        %v1298 = vsub.f32 %v1290, %v1294
        %v1299 = vsub.f32 %v1291, %v1297
        %v1300 = vmul.f32 %v1298, 1.442695
        %v1301 = vpow.pop %v1300
        %v1302 = vmul.f32 %v1299, 1.442695
        %v1303 = vpow.pop %v1302
        %v1304 = vsel %vm886, %v1301, 0.0
        %1305 = vadd.xlane.f32.xlu0 %v1304
        %v1306 = vpop.xlane.xlu0 %1305
        %v1307 = vsel %vm886, %v1303, 0.0
        %1308 = vadd.xlane.f32.xlu0 %v1307
        %v1309 = vpop.xlane.xlu0 %1308
        %v1310 = vrcp.pop %v1306
        %v1311 = vmul.f32 %v1306, %v1310
        %v1312 = vsub.f32 1.0, %v1311
        %v1313 = vmul.f32 %v1310, %v1312
        %v1314 = vadd.f32 %v1310, %v1313
        %vm1315 = vweird.f32 %v1306
        %vm1316 = vweird.f32 %v1310
        %vm1317 = vmor %vm1315, %vm1316
        %v1318 = vsel %vm1317, %v1310, %v1314
        %v1319 = vand.u32 2147483647, %v1306
        %vm1320 = vcmp.eq.f32.partialorder %v1319, 8.507059e+37
        %v1321 = vand.u32 %v1306, 2147483648
        %v1322 = vor.u32 1.1754944e-38, %v1321
        %v1323 = vsel %vm1320, %v1322, %v1318
        %v1324 = vmul.f32 %v1301, %v1323
        %v1325 = vrcp.pop %v1309
        %v1326 = vmul.f32 %v1309, %v1325
        %v1327 = vsub.f32 1.0, %v1326
        %v1328 = vmul.f32 %v1325, %v1327
        %v1329 = vadd.f32 %v1325, %v1328
        %vm1330 = vweird.f32 %v1309
        %vm1331 = vweird.f32 %v1325
        %vm1332 = vmor %vm1330, %vm1331
        %v1333 = vsel %vm1332, %v1325, %v1329
        %v1334 = vand.u32 2147483647, %v1309
        %vm1335 = vcmp.eq.f32.partialorder %v1334, 8.507059e+37
        %v1336 = vand.u32 %v1309, 2147483648
        %v1337 = vor.u32 1.1754944e-38, %v1336
        %v1338 = vsel %vm1335, %v1337, %v1333
        %v1339 = vmul.f32 %v1303, %v1338
        %1340 = vrot.lane.b32.xlu0 %v881, 80
        %v1341 = vpop.permute.xlu0 %1340
        %1342 = vrot.lane.b32.xlu0 %v884, 80
        %v1343 = vpop.permute.xlu0 %1342
        %v1347 = vsel %vm886, %v1324, 0
        %v1350 = vsel %vm886, %v1339, 0
        %1352 = vmatpush.msra.mxu0 0.0
        %1353 = vmatpush.msra.mxu0 0.0
        %1354 = vmatpush.msra.mxu0 0.0
        %1355 = vmatpush.msra.mxu0 0.0
        %1356 = vmatpush.msra.mxu0 0.0
        %1357 = vmatpush.msra.mxu0 0.0
        %1358 = vmatpush.msra.mxu0 0.0
        %1359 = vmatpush.msra.mxu0 0.0
        %1360 = vmatpush.msra.mxu0 0.0
        %1361 = vmatpush.msra.mxu0 0.0
        %1362 = vmatpush.msra.mxu0 0.0
        %1363 = vmatpush.msra.mxu0 0.0
        %1364 = vmatpush.msra.mxu0 0.0
        %1365 = vmatpush.msra.mxu0 0.0
        %1366 = vmatpush.msra.mxu0 %v1343
        %1367 = vmatpush.msra.mxu0 %v1341
        %1368 = vmatmul.f32.gmra.mxu0 %v1347
        %v1369 = vpop.f32.mrf.mxu0
        %v1370 = vadd.f32 0.0, %v1369
        %1371 = vmatmul.f32.gmra.mxu0 %v1350
        %v1372 = vpop.f32.mrf.mxu0
        %v1373 = vadd.f32 0.0, %v1372
        %1374 = vdwg.mxu0
        %1375 = vrot.lane.b32.xlu0 %v795, 64
        %v1376 = vpop.permute.xlu0 %1375
        %1377 = vrot.lane.b32.xlu0 %v798, 64
        %v1378 = vpop.permute.xlu0 %1377
        %1379 = vrot.lane.b32.xlu0 %v838, 64
        %v1380 = vpop.permute.xlu0 %1379
        %1381 = vrot.lane.b32.xlu0 %v841, 64
        %v1382 = vpop.permute.xlu0 %1381
        %v1383 = vsel %vm886, %v1376, 0
        %v1385 = vsel %vm886, %v1378, 0
        %v1387 = vsel %vm886, %v1380, 0
        %v1389 = vsel %vm886, %v1382, 0
        %1391 = vmatpush.xpose.msra.mxu0 0.0
        %1392 = vmatpush.xpose.msra.mxu0 0.0
        %1393 = vmatpush.xpose.msra.mxu0 0.0
        %1394 = vmatpush.xpose.msra.mxu0 0.0
        %1395 = vmatpush.xpose.msra.mxu0 0.0
        %1396 = vmatpush.xpose.msra.mxu0 0.0
        %1397 = vmatpush.xpose.msra.mxu0 0.0
        %1398 = vmatpush.xpose.msra.mxu0 0.0
        %1399 = vmatpush.xpose.msra.mxu0 0.0
        %1400 = vmatpush.xpose.msra.mxu0 0.0
        %1401 = vmatpush.xpose.msra.mxu0 0.0
        %1402 = vmatpush.xpose.msra.mxu0 0.0
        %1403 = vmatpush.xpose.msra.mxu0 0.0
        %1404 = vmatpush.xpose.msra.mxu0 0.0
        %1405 = vmatpush.xpose.msra.mxu0 %v1389
        %1406 = vmatpush.xpose.msra.mxu0 %v1387
        %1407 = vmatmul.f32.gmra.mxu0 %v1383
        %v1408 = vpop.f32.mrf.mxu0
        %v1409 = vadd.f32 0.0, %v1408
        %1410 = vmatmul.f32.gmra.mxu0 %v1385
        %v1411 = vpop.f32.mrf.mxu0
        %v1412 = vadd.f32 0.0, %v1411
        %1413 = vdwg.mxu0
        %v1414 = vmul.f32 %v1409, 0.25
        %v1415 = vmul.f32 %v1412, 0.25
        %v1416 = vsel %vm886, %v1414, -inf
        %1417 = vmax.xlane.f32.xlu0 %v1416
        %v1418 = vpop.xlane.xlu0 %1417
        %v1419 = vsel %vm886, %v1415, -inf
        %1420 = vmax.xlane.f32.xlu0 %v1419
        %v1421 = vpop.xlane.xlu0 %1420
        %v1422 = vsub.f32 %v1414, %v1418
        %v1423 = vsub.f32 %v1415, %v1421
        %v1424 = vmul.f32 %v1422, 1.442695
        %v1425 = vpow.pop %v1424
        %v1426 = vmul.f32 %v1423, 1.442695
        %v1427 = vpow.pop %v1426
        %v1428 = vsel %vm886, %v1425, 0.0
        %1429 = vadd.xlane.f32.xlu0 %v1428
        %v1430 = vpop.xlane.xlu0 %1429
        %v1431 = vsel %vm886, %v1427, 0.0
        %1432 = vadd.xlane.f32.xlu0 %v1431
        %v1433 = vpop.xlane.xlu0 %1432
        %v1434 = vrcp.pop %v1430
        %v1435 = vmul.f32 %v1430, %v1434
        %v1436 = vsub.f32 1.0, %v1435
        %v1437 = vmul.f32 %v1434, %v1436
        %v1438 = vadd.f32 %v1434, %v1437
        %vm1439 = vweird.f32 %v1430
        %vm1440 = vweird.f32 %v1434
        %vm1441 = vmor %vm1439, %vm1440
        %v1442 = vsel %vm1441, %v1434, %v1438
        %v1443 = vand.u32 2147483647, %v1430
        %vm1444 = vcmp.eq.f32.partialorder %v1443, 8.507059e+37
        %v1445 = vand.u32 %v1430, 2147483648
        %v1446 = vor.u32 1.1754944e-38, %v1445
        %v1447 = vsel %vm1444, %v1446, %v1442
        %v1448 = vmul.f32 %v1425, %v1447
        %v1449 = vrcp.pop %v1433
        %v1450 = vmul.f32 %v1433, %v1449
        %v1451 = vsub.f32 1.0, %v1450
        %v1452 = vmul.f32 %v1449, %v1451
        %v1453 = vadd.f32 %v1449, %v1452
        %vm1454 = vweird.f32 %v1433
        %vm1455 = vweird.f32 %v1449
        %vm1456 = vmor %vm1454, %vm1455
        %v1457 = vsel %vm1456, %v1449, %v1453
        %v1458 = vand.u32 2147483647, %v1433
        %vm1459 = vcmp.eq.f32.partialorder %v1458, 8.507059e+37
        %v1460 = vand.u32 %v1433, 2147483648
        %v1461 = vor.u32 1.1754944e-38, %v1460
        %v1462 = vsel %vm1459, %v1461, %v1457
        %v1463 = vmul.f32 %v1427, %v1462
        %1464 = vrot.lane.b32.xlu0 %v881, 64
        %v1465 = vpop.permute.xlu0 %1464
        %1466 = vrot.lane.b32.xlu0 %v884, 64
        %v1467 = vpop.permute.xlu0 %1466
        %v1471 = vsel %vm886, %v1448, 0
        %v1474 = vsel %vm886, %v1463, 0
        %1476 = vmatpush.msra.mxu0 0.0
        %1477 = vmatpush.msra.mxu0 0.0
        %1478 = vmatpush.msra.mxu0 0.0
        %1479 = vmatpush.msra.mxu0 0.0
        %1480 = vmatpush.msra.mxu0 0.0
        %1481 = vmatpush.msra.mxu0 0.0
        %1482 = vmatpush.msra.mxu0 0.0
        %1483 = vmatpush.msra.mxu0 0.0
        %1484 = vmatpush.msra.mxu0 0.0
        %1485 = vmatpush.msra.mxu0 0.0
        %1486 = vmatpush.msra.mxu0 0.0
        %1487 = vmatpush.msra.mxu0 0.0
        %1488 = vmatpush.msra.mxu0 0.0
        %1489 = vmatpush.msra.mxu0 0.0
        %1490 = vmatpush.msra.mxu0 %v1467
        %1491 = vmatpush.msra.mxu0 %v1465
        %1492 = vmatmul.f32.gmra.mxu0 %v1471
        %v1493 = vpop.f32.mrf.mxu0
        %v1494 = vadd.f32 0.0, %v1493
        %1495 = vmatmul.f32.gmra.mxu0 %v1474
        %v1496 = vpop.f32.mrf.mxu0
        %v1497 = vadd.f32 0.0, %v1496
        %1498 = vdwg.mxu0
        %1499 = vrot.lane.b32.xlu0 %v795, 48
        %v1500 = vpop.permute.xlu0 %1499
        %1501 = vrot.lane.b32.xlu0 %v798, 48
        %v1502 = vpop.permute.xlu0 %1501
        %1503 = vrot.lane.b32.xlu0 %v838, 48
        %v1504 = vpop.permute.xlu0 %1503
        %1505 = vrot.lane.b32.xlu0 %v841, 48
        %v1506 = vpop.permute.xlu0 %1505
        %v1507 = vsel %vm886, %v1500, 0
        %v1509 = vsel %vm886, %v1502, 0
        %v1511 = vsel %vm886, %v1504, 0
        %v1513 = vsel %vm886, %v1506, 0
        %1515 = vmatpush.xpose.msra.mxu0 0.0
        %1516 = vmatpush.xpose.msra.mxu0 0.0
        %1517 = vmatpush.xpose.msra.mxu0 0.0
        %1518 = vmatpush.xpose.msra.mxu0 0.0
        %1519 = vmatpush.xpose.msra.mxu0 0.0
        %1520 = vmatpush.xpose.msra.mxu0 0.0
        %1521 = vmatpush.xpose.msra.mxu0 0.0
        %1522 = vmatpush.xpose.msra.mxu0 0.0
        %1523 = vmatpush.xpose.msra.mxu0 0.0
        %1524 = vmatpush.xpose.msra.mxu0 0.0
        %1525 = vmatpush.xpose.msra.mxu0 0.0
        %1526 = vmatpush.xpose.msra.mxu0 0.0
        %1527 = vmatpush.xpose.msra.mxu0 0.0
        %1528 = vmatpush.xpose.msra.mxu0 0.0
        %1529 = vmatpush.xpose.msra.mxu0 %v1513
        %1530 = vmatpush.xpose.msra.mxu0 %v1511
        %1531 = vmatmul.f32.gmra.mxu0 %v1507
        %v1532 = vpop.f32.mrf.mxu0
        %v1533 = vadd.f32 0.0, %v1532
        %1534 = vmatmul.f32.gmra.mxu0 %v1509
        %v1535 = vpop.f32.mrf.mxu0
        %v1536 = vadd.f32 0.0, %v1535
        %1537 = vdwg.mxu0
        %v1538 = vmul.f32 %v1533, 0.25
        %v1539 = vmul.f32 %v1536, 0.25
        %v1540 = vsel %vm886, %v1538, -inf
        %1541 = vmax.xlane.f32.xlu0 %v1540
        %v1542 = vpop.xlane.xlu0 %1541
        %v1543 = vsel %vm886, %v1539, -inf
        %1544 = vmax.xlane.f32.xlu0 %v1543
        %v1545 = vpop.xlane.xlu0 %1544
        %v1546 = vsub.f32 %v1538, %v1542
        %v1547 = vsub.f32 %v1539, %v1545
        %v1548 = vmul.f32 %v1546, 1.442695
        %v1549 = vpow.pop %v1548
        %v1550 = vmul.f32 %v1547, 1.442695
        %v1551 = vpow.pop %v1550
        %v1552 = vsel %vm886, %v1549, 0.0
        %1553 = vadd.xlane.f32.xlu0 %v1552
        %v1554 = vpop.xlane.xlu0 %1553
        %v1555 = vsel %vm886, %v1551, 0.0
        %1556 = vadd.xlane.f32.xlu0 %v1555
        %v1557 = vpop.xlane.xlu0 %1556
        %v1558 = vrcp.pop %v1554
        %v1559 = vmul.f32 %v1554, %v1558
        %v1560 = vsub.f32 1.0, %v1559
        %v1561 = vmul.f32 %v1558, %v1560
        %v1562 = vadd.f32 %v1558, %v1561
        %vm1563 = vweird.f32 %v1554
        %vm1564 = vweird.f32 %v1558
        %vm1565 = vmor %vm1563, %vm1564
        %v1566 = vsel %vm1565, %v1558, %v1562
        %v1567 = vand.u32 2147483647, %v1554
        %vm1568 = vcmp.eq.f32.partialorder %v1567, 8.507059e+37
        %v1569 = vand.u32 %v1554, 2147483648
        %v1570 = vor.u32 1.1754944e-38, %v1569
        %v1571 = vsel %vm1568, %v1570, %v1566
        %v1572 = vmul.f32 %v1549, %v1571
        %v1573 = vrcp.pop %v1557
        %v1574 = vmul.f32 %v1557, %v1573
        %v1575 = vsub.f32 1.0, %v1574
        %v1576 = vmul.f32 %v1573, %v1575
        %v1577 = vadd.f32 %v1573, %v1576
        %vm1578 = vweird.f32 %v1557
        %vm1579 = vweird.f32 %v1573
        %vm1580 = vmor %vm1578, %vm1579
        %v1581 = vsel %vm1580, %v1573, %v1577
        %v1582 = vand.u32 2147483647, %v1557
        %vm1583 = vcmp.eq.f32.partialorder %v1582, 8.507059e+37
        %v1584 = vand.u32 %v1557, 2147483648
        %v1585 = vor.u32 1.1754944e-38, %v1584
        %v1586 = vsel %vm1583, %v1585, %v1581
        %v1587 = vmul.f32 %v1551, %v1586
        %1588 = vrot.lane.b32.xlu0 %v881, 48
        %v1589 = vpop.permute.xlu0 %1588
        %1590 = vrot.lane.b32.xlu0 %v884, 48
        %v1591 = vpop.permute.xlu0 %1590
        %v1595 = vsel %vm886, %v1572, 0
        %v1598 = vsel %vm886, %v1587, 0
        %1600 = vmatpush.msra.mxu0 0.0
        %1601 = vmatpush.msra.mxu0 0.0
        %1602 = vmatpush.msra.mxu0 0.0
        %1603 = vmatpush.msra.mxu0 0.0
        %1604 = vmatpush.msra.mxu0 0.0
        %1605 = vmatpush.msra.mxu0 0.0
        %1606 = vmatpush.msra.mxu0 0.0
        %1607 = vmatpush.msra.mxu0 0.0
        %1608 = vmatpush.msra.mxu0 0.0
        %1609 = vmatpush.msra.mxu0 0.0
        %1610 = vmatpush.msra.mxu0 0.0
        %1611 = vmatpush.msra.mxu0 0.0
        %1612 = vmatpush.msra.mxu0 0.0
        %1613 = vmatpush.msra.mxu0 0.0
        %1614 = vmatpush.msra.mxu0 %v1591
        %1615 = vmatpush.msra.mxu0 %v1589
        %1616 = vmatmul.f32.gmra.mxu0 %v1595
        %v1617 = vpop.f32.mrf.mxu0
        %v1618 = vadd.f32 0.0, %v1617
        %1619 = vmatmul.f32.gmra.mxu0 %v1598
        %v1620 = vpop.f32.mrf.mxu0
        %v1621 = vadd.f32 0.0, %v1620
        %1622 = vdwg.mxu0
        %1623 = vrot.lane.b32.xlu0 %v795, 32
        %v1624 = vpop.permute.xlu0 %1623
        %1625 = vrot.lane.b32.xlu0 %v798, 32
        %v1626 = vpop.permute.xlu0 %1625
        %1627 = vrot.lane.b32.xlu0 %v838, 32
        %v1628 = vpop.permute.xlu0 %1627
        %1629 = vrot.lane.b32.xlu0 %v841, 32
        %v1630 = vpop.permute.xlu0 %1629
        %v1631 = vsel %vm886, %v1624, 0
        %v1633 = vsel %vm886, %v1626, 0
        %v1635 = vsel %vm886, %v1628, 0
        %v1637 = vsel %vm886, %v1630, 0
        %1639 = vmatpush.xpose.msra.mxu0 0.0
        %1640 = vmatpush.xpose.msra.mxu0 0.0
        %1641 = vmatpush.xpose.msra.mxu0 0.0
        %1642 = vmatpush.xpose.msra.mxu0 0.0
        %1643 = vmatpush.xpose.msra.mxu0 0.0
        %1644 = vmatpush.xpose.msra.mxu0 0.0
        %1645 = vmatpush.xpose.msra.mxu0 0.0
        %1646 = vmatpush.xpose.msra.mxu0 0.0
        %1647 = vmatpush.xpose.msra.mxu0 0.0
        %1648 = vmatpush.xpose.msra.mxu0 0.0
        %1649 = vmatpush.xpose.msra.mxu0 0.0
        %1650 = vmatpush.xpose.msra.mxu0 0.0
        %1651 = vmatpush.xpose.msra.mxu0 0.0
        %1652 = vmatpush.xpose.msra.mxu0 0.0
        %1653 = vmatpush.xpose.msra.mxu0 %v1637
        %1654 = vmatpush.xpose.msra.mxu0 %v1635
        %1655 = vmatmul.f32.gmra.mxu0 %v1631
        %v1656 = vpop.f32.mrf.mxu0
        %v1657 = vadd.f32 0.0, %v1656
        %1658 = vmatmul.f32.gmra.mxu0 %v1633
        %v1659 = vpop.f32.mrf.mxu0
        %v1660 = vadd.f32 0.0, %v1659
        %1661 = vdwg.mxu0
        %v1662 = vmul.f32 %v1657, 0.25
        %v1663 = vmul.f32 %v1660, 0.25
        %v1664 = vsel %vm886, %v1662, -inf
        %1665 = vmax.xlane.f32.xlu0 %v1664
        %v1666 = vpop.xlane.xlu0 %1665
        %v1667 = vsel %vm886, %v1663, -inf
        %1668 = vmax.xlane.f32.xlu0 %v1667
        %v1669 = vpop.xlane.xlu0 %1668
        %v1670 = vsub.f32 %v1662, %v1666
        %v1671 = vsub.f32 %v1663, %v1669
        %v1672 = vmul.f32 %v1670, 1.442695
        %v1673 = vpow.pop %v1672
        %v1674 = vmul.f32 %v1671, 1.442695
        %v1675 = vpow.pop %v1674
        %v1676 = vsel %vm886, %v1673, 0.0
        %1677 = vadd.xlane.f32.xlu0 %v1676
        %v1678 = vpop.xlane.xlu0 %1677
        %v1679 = vsel %vm886, %v1675, 0.0
        %1680 = vadd.xlane.f32.xlu0 %v1679
        %v1681 = vpop.xlane.xlu0 %1680
        %v1682 = vrcp.pop %v1678
        %v1683 = vmul.f32 %v1678, %v1682
        %v1684 = vsub.f32 1.0, %v1683
        %v1685 = vmul.f32 %v1682, %v1684
        %v1686 = vadd.f32 %v1682, %v1685
        %vm1687 = vweird.f32 %v1678
        %vm1688 = vweird.f32 %v1682
        %vm1689 = vmor %vm1687, %vm1688
        %v1690 = vsel %vm1689, %v1682, %v1686
        %v1691 = vand.u32 2147483647, %v1678
        %vm1692 = vcmp.eq.f32.partialorder %v1691, 8.507059e+37
        %v1693 = vand.u32 %v1678, 2147483648
        %v1694 = vor.u32 1.1754944e-38, %v1693
        %v1695 = vsel %vm1692, %v1694, %v1690
        %v1696 = vmul.f32 %v1673, %v1695
        %v1697 = vrcp.pop %v1681
        %v1698 = vmul.f32 %v1681, %v1697
        %v1699 = vsub.f32 1.0, %v1698
        %v1700 = vmul.f32 %v1697, %v1699
        %v1701 = vadd.f32 %v1697, %v1700
        %vm1702 = vweird.f32 %v1681
        %vm1703 = vweird.f32 %v1697
        %vm1704 = vmor %vm1702, %vm1703
        %v1705 = vsel %vm1704, %v1697, %v1701
        %v1706 = vand.u32 2147483647, %v1681
        %vm1707 = vcmp.eq.f32.partialorder %v1706, 8.507059e+37
        %v1708 = vand.u32 %v1681, 2147483648
        %v1709 = vor.u32 1.1754944e-38, %v1708
        %v1710 = vsel %vm1707, %v1709, %v1705
        %v1711 = vmul.f32 %v1675, %v1710
        %1712 = vrot.lane.b32.xlu0 %v881, 32
        %v1713 = vpop.permute.xlu0 %1712
        %1714 = vrot.lane.b32.xlu0 %v884, 32
        %v1715 = vpop.permute.xlu0 %1714
        %v1719 = vsel %vm886, %v1696, 0
        %v1722 = vsel %vm886, %v1711, 0
        %1724 = vmatpush.msra.mxu0 0.0
        %1725 = vmatpush.msra.mxu0 0.0
        %1726 = vmatpush.msra.mxu0 0.0
        %1727 = vmatpush.msra.mxu0 0.0
        %1728 = vmatpush.msra.mxu0 0.0
        %1729 = vmatpush.msra.mxu0 0.0
        %1730 = vmatpush.msra.mxu0 0.0
        %1731 = vmatpush.msra.mxu0 0.0
        %1732 = vmatpush.msra.mxu0 0.0
        %1733 = vmatpush.msra.mxu0 0.0
        %1734 = vmatpush.msra.mxu0 0.0
        %1735 = vmatpush.msra.mxu0 0.0
        %1736 = vmatpush.msra.mxu0 0.0
        %1737 = vmatpush.msra.mxu0 0.0
        %1738 = vmatpush.msra.mxu0 %v1715
        %1739 = vmatpush.msra.mxu0 %v1713
        %1740 = vmatmul.f32.gmra.mxu0 %v1719
        %v1741 = vpop.f32.mrf.mxu0
        %v1742 = vadd.f32 0.0, %v1741
        %1743 = vmatmul.f32.gmra.mxu0 %v1722
        %v1744 = vpop.f32.mrf.mxu0
        %v1745 = vadd.f32 0.0, %v1744
        %1746 = vdwg.mxu0
        %1747 = vrot.lane.b32.xlu0 %v795, 16
        %v1748 = vpop.permute.xlu0 %1747
        %1749 = vrot.lane.b32.xlu0 %v798, 16
        %v1750 = vpop.permute.xlu0 %1749
        %1751 = vrot.lane.b32.xlu0 %v838, 16
        %v1752 = vpop.permute.xlu0 %1751
        %1753 = vrot.lane.b32.xlu0 %v841, 16
        %v1754 = vpop.permute.xlu0 %1753
        %v1755 = vsel %vm886, %v1748, 0
        %v1757 = vsel %vm886, %v1750, 0
        %v1759 = vsel %vm886, %v1752, 0
        %v1761 = vsel %vm886, %v1754, 0
        %1763 = vmatpush.xpose.msra.mxu0 0.0
        %1764 = vmatpush.xpose.msra.mxu0 0.0
        %1765 = vmatpush.xpose.msra.mxu0 0.0
        %1766 = vmatpush.xpose.msra.mxu0 0.0
        %1767 = vmatpush.xpose.msra.mxu0 0.0
        %1768 = vmatpush.xpose.msra.mxu0 0.0
        %1769 = vmatpush.xpose.msra.mxu0 0.0
        %1770 = vmatpush.xpose.msra.mxu0 0.0
        %1771 = vmatpush.xpose.msra.mxu0 0.0
        %1772 = vmatpush.xpose.msra.mxu0 0.0
        %1773 = vmatpush.xpose.msra.mxu0 0.0
        %1774 = vmatpush.xpose.msra.mxu0 0.0
        %1775 = vmatpush.xpose.msra.mxu0 0.0
        %1776 = vmatpush.xpose.msra.mxu0 0.0
        %1777 = vmatpush.xpose.msra.mxu0 %v1761
        %1778 = vmatpush.xpose.msra.mxu0 %v1759
        %1779 = vmatmul.f32.gmra.mxu0 %v1755
        %v1780 = vpop.f32.mrf.mxu0
        %v1781 = vadd.f32 0.0, %v1780
        %1782 = vmatmul.f32.gmra.mxu0 %v1757
        %v1783 = vpop.f32.mrf.mxu0
        %v1784 = vadd.f32 0.0, %v1783
        %1785 = vdwg.mxu0
        %v1786 = vmul.f32 %v1781, 0.25
        %v1787 = vmul.f32 %v1784, 0.25
        %v1788 = vsel %vm886, %v1786, -inf
        %1789 = vmax.xlane.f32.xlu0 %v1788
        %v1790 = vpop.xlane.xlu0 %1789
        %v1791 = vsel %vm886, %v1787, -inf
        %1792 = vmax.xlane.f32.xlu0 %v1791
        %v1793 = vpop.xlane.xlu0 %1792
        %v1794 = vsub.f32 %v1786, %v1790
        %v1795 = vsub.f32 %v1787, %v1793
        %v1796 = vmul.f32 %v1794, 1.442695
        %v1797 = vpow.pop %v1796
        %v1798 = vmul.f32 %v1795, 1.442695
        %v1799 = vpow.pop %v1798
        %v1800 = vsel %vm886, %v1797, 0.0
        %1801 = vadd.xlane.f32.xlu0 %v1800
        %v1802 = vpop.xlane.xlu0 %1801
        %v1803 = vsel %vm886, %v1799, 0.0
        %1804 = vadd.xlane.f32.xlu0 %v1803
        %v1805 = vpop.xlane.xlu0 %1804
        %v1806 = vrcp.pop %v1802
        %v1807 = vmul.f32 %v1802, %v1806
        %v1808 = vsub.f32 1.0, %v1807
        %v1809 = vmul.f32 %v1806, %v1808
        %v1810 = vadd.f32 %v1806, %v1809
        %vm1811 = vweird.f32 %v1802
        %vm1812 = vweird.f32 %v1806
        %vm1813 = vmor %vm1811, %vm1812
        %v1814 = vsel %vm1813, %v1806, %v1810
        %v1815 = vand.u32 2147483647, %v1802
        %vm1816 = vcmp.eq.f32.partialorder %v1815, 8.507059e+37
        %v1817 = vand.u32 %v1802, 2147483648
        %v1818 = vor.u32 1.1754944e-38, %v1817
        %v1819 = vsel %vm1816, %v1818, %v1814
        %v1820 = vmul.f32 %v1797, %v1819
        %v1821 = vrcp.pop %v1805
        %v1822 = vmul.f32 %v1805, %v1821
        %v1823 = vsub.f32 1.0, %v1822
        %v1824 = vmul.f32 %v1821, %v1823
        %v1825 = vadd.f32 %v1821, %v1824
        %vm1826 = vweird.f32 %v1805
        %vm1827 = vweird.f32 %v1821
        %vm1828 = vmor %vm1826, %vm1827
        %v1829 = vsel %vm1828, %v1821, %v1825
        %v1830 = vand.u32 2147483647, %v1805
        %vm1831 = vcmp.eq.f32.partialorder %v1830, 8.507059e+37
        %v1832 = vand.u32 %v1805, 2147483648
        %v1833 = vor.u32 1.1754944e-38, %v1832
        %v1834 = vsel %vm1831, %v1833, %v1829
        %v1835 = vmul.f32 %v1799, %v1834
        %1836 = vrot.lane.b32.xlu0 %v881, 16
        %v1837 = vpop.permute.xlu0 %1836
        %1838 = vrot.lane.b32.xlu0 %v884, 16
        %v1839 = vpop.permute.xlu0 %1838
        %v1843 = vsel %vm886, %v1820, 0
        %v1846 = vsel %vm886, %v1835, 0
        %1848 = vmatpush.msra.mxu0 0.0
        %1849 = vmatpush.msra.mxu0 0.0
        %1850 = vmatpush.msra.mxu0 0.0
        %1851 = vmatpush.msra.mxu0 0.0
        %1852 = vmatpush.msra.mxu0 0.0
        %1853 = vmatpush.msra.mxu0 0.0
        %1854 = vmatpush.msra.mxu0 0.0
        %1855 = vmatpush.msra.mxu0 0.0
        %1856 = vmatpush.msra.mxu0 0.0
        %1857 = vmatpush.msra.mxu0 0.0
        %1858 = vmatpush.msra.mxu0 0.0
        %1859 = vmatpush.msra.mxu0 0.0
        %1860 = vmatpush.msra.mxu0 0.0
        %1861 = vmatpush.msra.mxu0 0.0
        %1862 = vmatpush.msra.mxu0 %v1839
        %1863 = vmatpush.msra.mxu0 %v1837
        %1864 = vmatmul.f32.gmra.mxu0 %v1843
        %v1865 = vpop.f32.mrf.mxu0
        %v1866 = vadd.f32 0.0, %v1865
        %1867 = vmatmul.f32.gmra.mxu0 %v1846
        %v1868 = vpop.f32.mrf.mxu0
        %v1869 = vadd.f32 0.0, %v1868
        %1870 = vdwg.mxu0
        %1873 = vrot.lane.b32.xlu0 %v1122, 16
        %v1874 = vpop.permute.xlu0 %1873
        %1875 = vrot.lane.b32.xlu0 %v1125, 16
        %v1876 = vpop.permute.xlu0 %1875
        %1881 = vrot.lane.b32.xlu0 %v1246, 32
        %v1882 = vpop.permute.xlu0 %1881
        %1883 = vrot.lane.b32.xlu0 %v1249, 32
        %v1884 = vpop.permute.xlu0 %1883
        %1889 = vrot.lane.b32.xlu0 %v1370, 48
        %v1890 = vpop.permute.xlu0 %1889
        %1891 = vrot.lane.b32.xlu0 %v1373, 48
        %v1892 = vpop.permute.xlu0 %1891
        %1897 = vrot.lane.b32.xlu0 %v1494, 64
        %v1898 = vpop.permute.xlu0 %1897
        %1899 = vrot.lane.b32.xlu0 %v1497, 64
        %v1900 = vpop.permute.xlu0 %1899
        %1905 = vrot.lane.b32.xlu0 %v1618, 80
        %v1906 = vpop.permute.xlu0 %1905
        %1907 = vrot.lane.b32.xlu0 %v1621, 80
        %v1908 = vpop.permute.xlu0 %1907
        %1913 = vrot.lane.b32.xlu0 %v1742, 96
        %v1914 = vpop.permute.xlu0 %1913
        %1915 = vrot.lane.b32.xlu0 %v1745, 96
        %v1916 = vpop.permute.xlu0 %1915
        %1921 = vrot.lane.b32.xlu0 %v1866, 112
        %v1922 = vpop.permute.xlu0 %1921
        %1923 = vrot.lane.b32.xlu0 %v1869, 112
        %v1924 = vpop.permute.xlu0 %1923
        %v1927 = vsel %vm886, %v996, %v1874
        %v1928 = vsel %vm886, %v999, %v1876
        %vm1929 = vcmask 261120
        %v1930 = vsel %vm1929, %v1927, %v1882
        %v1931 = vsel %vm1929, %v1928, %v1884
        %vm1932 = vcmask 392192
        %v1933 = vsel %vm1932, %v1930, %v1890
        %v1934 = vsel %vm1932, %v1931, %v1892
        %vm1935 = vcmask 523264
        %v1936 = vsel %vm1935, %v1933, %v1898
        %v1937 = vsel %vm1935, %v1934, %v1900
        %vm1938 = vcmask 654336
        %v1939 = vsel %vm1938, %v1936, %v1906
        %v1940 = vsel %vm1938, %v1937, %v1908
        %vm1941 = vcmask 785408
        %v1942 = vsel %vm1941, %v1939, %v1914
        %v1943 = vsel %vm1941, %v1940, %v1916
        %vm1944 = vcmask 916480
        %v1945 = vsel %vm1944, %v1942, %v1922
        %v1946 = vsel %vm1944, %v1943, %v1924
        %1947 = vadd.xlane.f32.xlu0 %v1945
        %v1948 = vpop.xlane.xlu0 %1947
        %1949 = vadd.xlane.f32.xlu0 %v1946
        %v1950 = vpop.xlane.xlu0 %1949
        %v1951 = vmul.f32 %v1948, %v708
        %v1952 = vmul.f32 %v1950, %v708
        %v1953 = vsub.f32 %v1945, %v1951
        %v1954 = vsub.f32 %v1946, %v1952
        %v1955 = vmul.f32 %v1953, %v1953
        %v1956 = vmul.f32 %v1954, %v1954
        %1957 = vadd.xlane.f32.xlu0 %v1955
        %v1958 = vpop.xlane.xlu0 %1957
        %1959 = vadd.xlane.f32.xlu0 %v1956
        %v1960 = vpop.xlane.xlu0 %1959
        %v1961 = vmul.f32 %v1958, %v708
        %v1962 = vmul.f32 %v1960, %v708
        %v1963 = vadd.f32 %v1961, 1e-05
        %v1964 = vadd.f32 %v1962, 1e-05
        %v1965 = vrsqrt.pop %v1963
        %v1966 = vmul.f32 %v1965, %v1963
        %v1967 = vmul.f32 %v1966, %v1965
        %v1968 = vmul.f32 0.5, %v1967
        %v1969 = vsub.f32 1.5, %v1968
        %v1970 = vmul.f32 %v1965, %v1969
        %vm1971 = vweird.f32 %v1963
        %vm1972 = vweird.f32 %v1965
        %vm1973 = vmor %vm1971, %vm1972
        %v1974 = vsel %vm1973, %v1965, %v1970
        %v1975 = vrsqrt.pop %v1964
        %v1976 = vmul.f32 %v1975, %v1964
        %v1977 = vmul.f32 %v1976, %v1975
        %v1978 = vmul.f32 0.5, %v1977
        %v1979 = vsub.f32 1.5, %v1978
        %v1980 = vmul.f32 %v1975, %v1979
        %vm1981 = vweird.f32 %v1964
        %vm1982 = vweird.f32 %v1975
        %vm1983 = vmor %vm1981, %vm1982
        %v1984 = vsel %vm1983, %v1975, %v1980
        %v1985 = vmul.f32 %v1953, %v1974
        %v1986 = vmul.f32 %v1954, %v1984
        %v1987 = vld [vmem:[%s11] sm:$0x1]
        %v1989 = vperm.slane %v1987, 0
        %v1991 = vmul.f32 %v1985, %v1989
        %v1992 = vmul.f32 %v1986, %v1989
        %v1993 = vld [vmem:[%s12] sm:$0x1]
        %v1995 = vperm.slane %v1993, 0
        %v1997 = vadd.f32 %v1991, %v1995
        %v1998 = vadd.f32 %v1992, %v1995
        %v1999 = vld [vmem:[%s13] sm:$0xff]
        %v2000 = vld [vmem:[%s13 + $0x8] sm:$0xff]
        %v2001 = vld [vmem:[%s13 + $0x10] sm:$0xff]
        %v2002 = vld [vmem:[%s13 + $0x18] sm:$0xff]
        %v2003 = vld [vmem:[%s13 + $0x20] sm:$0xff]
        %v2004 = vld [vmem:[%s13 + $0x28] sm:$0xff]
        %v2005 = vld [vmem:[%s13 + $0x30] sm:$0xff]
        %v2006 = vld [vmem:[%s13 + $0x38] sm:$0xff]
        %v2007 = vld [vmem:[%s13 + $0x40] sm:$0xff]
        %v2008 = vld [vmem:[%s13 + $0x48] sm:$0xff]
        %v2009 = vld [vmem:[%s13 + $0x50] sm:$0xff]
        %v2010 = vld [vmem:[%s13 + $0x58] sm:$0xff]
        %v2011 = vld [vmem:[%s13 + $0x60] sm:$0xff]
        %v2012 = vld [vmem:[%s13 + $0x68] sm:$0xff]
        %v2013 = vld [vmem:[%s13 + $0x70] sm:$0xff]
        %v2014 = vld [vmem:[%s13 + $0x78] sm:$0xff]
        %v2015 = vld [vmem:[%s14] sm:$0x1]
        %v2017 = vperm.slane %v2015, 0
        %2019 = vmatpush.msra.mxu0 %v2014
        %2020 = vmatpush.msra.mxu0 %v2013
        %2021 = vmatpush.msra.mxu0 %v2012
        %2022 = vmatpush.msra.mxu0 %v2011
        %2023 = vmatpush.msra.mxu0 %v2010
        %2024 = vmatpush.msra.mxu0 %v2009
        %2025 = vmatpush.msra.mxu0 %v2008
        %2026 = vmatpush.msra.mxu0 %v2007
        %2027 = vmatpush.msra.mxu0 %v2006
        %2028 = vmatpush.msra.mxu0 %v2005
        %2029 = vmatpush.msra.mxu0 %v2004
        %2030 = vmatpush.msra.mxu0 %v2003
        %2031 = vmatpush.msra.mxu0 %v2002
        %2032 = vmatpush.msra.mxu0 %v2001
        %2033 = vmatpush.msra.mxu0 %v2000
        %2034 = vmatpush.msra.mxu0 %v1999
        %2035 = vmatmul.f32.gmra.mxu0 %v1997
        %v2036 = vpop.f32.mrf.mxu0
        %v2037 = vadd.f32 %v2017, %v2036
        %2038 = vmatmul.f32.gmra.mxu0 %v1998
        %v2039 = vpop.f32.mrf.mxu0
        %v2040 = vadd.f32 %v2017, %v2039
        %2041 = vdwg.mxu0
        %v2042 = vmax.f32 %v2037, 0.0
        %v2043 = vmax.f32 %v2040, 0.0
        %v2044 = vld [vmem:[%s15] sm:$0xff]
        %v2045 = vld [vmem:[%s15 + $0x8] sm:$0xff]
        %v2046 = vld [vmem:[%s15 + $0x10] sm:$0xff]
        %v2047 = vld [vmem:[%s15 + $0x18] sm:$0xff]
        %v2048 = vld [vmem:[%s15 + $0x20] sm:$0xff]
        %v2049 = vld [vmem:[%s15 + $0x28] sm:$0xff]
        %v2050 = vld [vmem:[%s15 + $0x30] sm:$0xff]
        %v2051 = vld [vmem:[%s15 + $0x38] sm:$0xff]
        %v2052 = vld [vmem:[%s16] sm:$0x1]
        %v2054 = vperm.slane %v2052, 0
        %v2057 = vsel %vm1935, %v2042, 0
        %v2060 = vsel %vm1935, %v2043, 0
        %2062 = vmatpush.msra.mxu0 0.0
        %2063 = vmatpush.msra.mxu0 0.0
        %2064 = vmatpush.msra.mxu0 0.0
        %2065 = vmatpush.msra.mxu0 0.0
        %2066 = vmatpush.msra.mxu0 0.0
        %2067 = vmatpush.msra.mxu0 0.0
        %2068 = vmatpush.msra.mxu0 0.0
        %2069 = vmatpush.msra.mxu0 0.0
        %2070 = vmatpush.msra.mxu0 %v2051
        %2071 = vmatpush.msra.mxu0 %v2050
        %2072 = vmatpush.msra.mxu0 %v2049
        %2073 = vmatpush.msra.mxu0 %v2048
        %2074 = vmatpush.msra.mxu0 %v2047
        %2075 = vmatpush.msra.mxu0 %v2046
        %2076 = vmatpush.msra.mxu0 %v2045
        %2077 = vmatpush.msra.mxu0 %v2044
        %2078 = vmatmul.f32.gmra.mxu0 %v2057
        %v2079 = vpop.f32.mrf.mxu0
        %v2080 = vadd.f32 %v2054, %v2079
        %2081 = vmatmul.f32.gmra.mxu0 %v2060
        %v2082 = vpop.f32.mrf.mxu0
        %v2083 = vadd.f32 %v2054, %v2082
        %2084 = vdwg.mxu0
        %v2085 = vadd.f32 %v1945, %v2080
        %v2086 = vadd.f32 %v1946, %v2083
        %2087 = vadd.xlane.f32.xlu0 %v2085
        %v2088 = vpop.xlane.xlu0 %2087
        %2089 = vadd.xlane.f32.xlu0 %v2086
        %v2090 = vpop.xlane.xlu0 %2089
        %v2091 = vmul.f32 %v2088, %v708
        %v2092 = vmul.f32 %v2090, %v708
        %v2093 = vsub.f32 %v2085, %v2091
        %v2094 = vsub.f32 %v2086, %v2092
        %v2095 = vmul.f32 %v2093, %v2093
        %v2096 = vmul.f32 %v2094, %v2094
        %2097 = vadd.xlane.f32.xlu0 %v2095
        %v2098 = vpop.xlane.xlu0 %2097
        %2099 = vadd.xlane.f32.xlu0 %v2096
        %v2100 = vpop.xlane.xlu0 %2099
        %v2101 = vmul.f32 %v2098, %v708
        %v2102 = vmul.f32 %v2100, %v708
        %v2103 = vadd.f32 %v2101, 1e-05
        %v2104 = vadd.f32 %v2102, 1e-05
        %v2105 = vrsqrt.pop %v2103
        %v2106 = vmul.f32 %v2105, %v2103
        %v2107 = vmul.f32 %v2106, %v2105
        %v2108 = vmul.f32 0.5, %v2107
        %v2109 = vsub.f32 1.5, %v2108
        %v2110 = vmul.f32 %v2105, %v2109
        %vm2111 = vweird.f32 %v2103
        %vm2112 = vweird.f32 %v2105
        %vm2113 = vmor %vm2111, %vm2112
        %v2114 = vsel %vm2113, %v2105, %v2110
        %v2115 = vrsqrt.pop %v2104
        %v2116 = vmul.f32 %v2115, %v2104
        %v2117 = vmul.f32 %v2116, %v2115
        %v2118 = vmul.f32 0.5, %v2117
        %v2119 = vsub.f32 1.5, %v2118
        %v2120 = vmul.f32 %v2115, %v2119
        %vm2121 = vweird.f32 %v2104
        %vm2122 = vweird.f32 %v2115
        %vm2123 = vmor %vm2121, %vm2122
        %v2124 = vsel %vm2123, %v2115, %v2120
        %v2125 = vmul.f32 %v2093, %v2114
        %v2126 = vmul.f32 %v2094, %v2124
        %2127 = vst [vmem:[%s652] sm:$0xff] %v2125
        %2128 = vst [vmem:[%s652 + $0x8] sm:$0xff] %v2126
        %s2129 = sand.u32 %s413, 1
        %s2130 = scalar_lea.sflag [#allocation4], %s2129
        %s2131 = sand.u32 %s413, 1
        %s2132 = smul.addr %s2131, 16
        %s2133 = scalar_lea.vmem [#allocation11], %s2132
        // Predicated region
        $region109: #{tpu_custom_call.1} parent=87 // pred_check
          %p2134 = pneg %p423
        $region110: #{tpu_custom_call.1} parent=87 // pred_check_branch
          %2136 = sbr.rel (%p2134) target = $region112
        $region111: #{tpu_custom_call.1} parent=87 // pred_region
          %2138 = vsyncadd %s2130, 0
          %s2139 = smul.addr %s38, 2
          %s2140 = smul.addr %s2139, 8
          %s2141 = scalar_lea.hbm %s17, %s2140
          %s2142 = sshll.u32 %s2133, 4
          %s2143 = int_to_ptr.vmem [resolvable:$true] %s2142
          %s2144 = sshll.u32 %s2141, 4
          %s2145 = int_to_ptr.hbm [resolvable:$true] %s2144
          %2150 = dma.vmem_to_hbm [thread:$0]  %s2143, 256, %s2145, %s2130, 128, 128, 8
        $region112: #{tpu_custom_call.1} parent=87 // pred_fallthru
          _
      $region88: #{tpu_custom_call.1} parent=5 // pred_fallthru
        _
      %p2151 = scmp.le.s32.totalorder 2, %s33
      // Predicated region
      $region113: #{tpu_custom_call.1} parent=5 // pred_check
        %p2152 = pneg %p2151
      $region114: #{tpu_custom_call.1} parent=5 // pred_check_branch
        %2154 = sbr.rel (%p2152) target = $region116
      $region115: #{tpu_custom_call.1} parent=5 // pred_region
        %s2155 = ssub.s32 %s33, 2
        // Predicated region
        $region117: #{tpu_custom_call.1} parent=115 // pred_check
          %p2156 = pneg %p429
        $region118: #{tpu_custom_call.1} parent=115 // pred_check_branch
          %2158 = sbr.rel (%p2156) target = $region120
        $region119: #{tpu_custom_call.1} parent=115 // pred_region
          %s2159 = sand.u32 %s414, 1
          %s2160 = scalar_lea.sflag [#allocation4], %s2159
          %s2161 = sand.u32 %s414, 1
          %s2162 = smul.addr %s2161, 16
          %s2163 = scalar_lea.vmem [#allocation11], %s2162
          %2165 = dma.done %s2160, 256
        $region120: #{tpu_custom_call.1} parent=115 // pred_fallthru
          _
      $region116: #{tpu_custom_call.1} parent=5 // pred_fallthru
        _
    $region6: #{tpu_custom_call.1} parent=1 // loop_footer
      %s37 = sadd.s32 1, %s33
    $region7: #{tpu_custom_call.1} parent=1 // loop_footer_branch
      %32 = sbr.rel target = $region3
    $region8: #{tpu_custom_call.1} parent=1 // loop_exit
      _
    %2166 = vsyncpa [#allocation3], 1
    %s2167 = scalar_lea.sflag [#allocation3], 1
    %2168 = vsyncpa %s2167, 1
    %2169 = vsyncpa [#allocation6], 1
    %s2170 = scalar_lea.sflag [#allocation6], 1
    %2171 = vsyncpa %s2170, 1
    %2172 = vsyncpa [#allocation9], 1
    %2173 = vsyncpa [#allocation4], 1
    %s2174 = scalar_lea.sflag [#allocation4], 1
    %2175 = vsyncpa %s2174, 1

</llo_original>
